<compile_context>
chip_gen: v5e
topology: v5e:2x2
jax: 0.10.0
libtpu: 0.0.40
codegen_flags: <defaults>
</compile_context>

<pallas_src>
import functools
import math

import jax
import jax.numpy as jnp
from jax import lax
from jax.experimental import pallas as pl
from jax.experimental.pallas import tpu as pltpu


# ------------------------------ fused kernel --------------------------------

def _bert_encoder_kernel(
    emb_ref, bias_ref,
    emb_ln_g_ref, emb_ln_b_ref,
    qkv_w_ref, qkv_b_ref, o_w_ref, o_b_ref,
    ln1_g_ref, ln1_b_ref,
    i_w_ref, i_b_ref, f_w_ref, f_b_ref,
    ln2_g_ref, ln2_b_ref,
    pool_w_ref, pool_b_ref, cls_w_ref, cls_b_ref,
    out_ref,
    *, num_layers, num_heads, head_dim, eps, scale):
    """One grid step = one batch element; everything stays in VMEM."""

    def layer_norm(h, g, b):
        mu = jnp.mean(h, axis=-1, keepdims=True)
        var = jnp.mean((h - mu) * (h - mu), axis=-1, keepdims=True)
        return (h - mu) * lax.rsqrt(var + eps) * g + b

    def gelu(y):
        # TODO(synk): HF BERT uses exact erf-GELU; tanh approximation used here
        # (erf lowering coverage on Mosaic varies).
        c = math.sqrt(2.0 / math.pi)
        return 0.5 * y * (1.0 + jnp.tanh(c * (y + 0.044715 * y * y * y)))

    H = num_heads * head_dim

    # Embedding LayerNorm (no zero residual).
    x = layer_norm(emb_ref[0], emb_ln_g_ref[...], emb_ln_b_ref[...])   # (S, H)
    bias = bias_ref[0]                                                 # (1, S)

    for l in range(num_layers):
        # Fused QKV projection: (S, H) @ (H, 3H).
        qkv = (jnp.dot(x, qkv_w_ref[l], preferred_element_type=jnp.float32)
               + qkv_b_ref[l])                                         # (S, 3H)

        ctx_heads = []
        for h in range(num_heads):
            lo = h * head_dim
            qh = qkv[:, lo:lo + head_dim]                              # (S, dH)
            kh = qkv[:, H + lo:H + lo + head_dim]                      # (S, dH)
            vh = qkv[:, 2 * H + lo:2 * H + lo + head_dim]              # (S, dH)
            # scores: contract last dims (no explicit transpose of K).
            s = lax.dot_general(qh, kh, (((1,), (1,)), ((), ())),
                                preferred_element_type=jnp.float32)
            s = s * scale + bias                                       # (S, S)
            s = s - jnp.max(s, axis=-1, keepdims=True)
            p = jnp.exp(s)
            p = p * pl.reciprocal(jnp.sum(p, axis=-1, keepdims=True),
                                  approx=True)
            ctx_heads.append(jnp.dot(p, vh,
                                     preferred_element_type=jnp.float32))
        ctx = jnp.concatenate(ctx_heads, axis=-1)                      # (S, H)

        attn_out = (jnp.dot(ctx, o_w_ref[l],
                            preferred_element_type=jnp.float32) + o_b_ref[l])
        h1 = layer_norm(attn_out + x, ln1_g_ref[l], ln1_b_ref[l])

        inter = gelu(jnp.dot(h1, i_w_ref[l],
                             preferred_element_type=jnp.float32) + i_b_ref[l])
        ffn = (jnp.dot(inter, f_w_ref[l],
                       preferred_element_type=jnp.float32) + f_b_ref[l])
        x = layer_norm(ffn + h1, ln2_g_ref[l], ln2_b_ref[l])

    # Pooler + classifier fused into the kernel tail.  Compute over all rows
    # (keeps M a multiple of the sublane tile) and keep only the [CLS] row.
    pooled = jnp.tanh(jnp.dot(x, pool_w_ref[...],
                              preferred_element_type=jnp.float32)
                      + pool_b_ref[...])                               # (S, H)
    logits_all = (jnp.dot(pooled, cls_w_ref[...],
                          preferred_element_type=jnp.float32)
                  + cls_b_ref[...])                                    # (S, 2)
    out_ref[0] = logits_all[0:1, :]                                    # [CLS]


# ------------------------------ model / wrapper ------------------------------

class Config:
    vocab_size = 64
    type_vocab_size = 2
    max_position_embeddings = 16
    hidden_size = 32
    num_layers = 2
    num_heads = 2
    intermediate_size = 64
    num_labels = 2


def init_params(key, cfg):
    H, I, L = cfg.hidden_size, cfg.intermediate_size, cfg.num_layers

    def nrm(k, shape):
        return 0.02 * jax.random.normal(k, shape, dtype=jnp.float32)

    keys = jax.random.split(key, 12)
    return {
        "word_emb": nrm(keys[0], (cfg.vocab_size, H)),
        "pos_emb": nrm(keys[1], (cfg.max_position_embeddings, H)),
        "type_emb": nrm(keys[2], (cfg.type_vocab_size, H)),
        "emb_ln_g": jnp.ones((H,), jnp.float32),
        "emb_ln_b": jnp.zeros((H,), jnp.float32),
        # Per-layer weights stacked along a leading L axis; QKV fused to (H, 3H).
        "qkv_w": nrm(keys[3], (L, H, 3 * H)),
        "qkv_b": jnp.zeros((L, 3 * H), jnp.float32),
        "o_w": nrm(keys[4], (L, H, H)),
        "o_b": jnp.zeros((L, H), jnp.float32),
        "ln1_g": jnp.ones((L, H), jnp.float32),
        "ln1_b": jnp.zeros((L, H), jnp.float32),
        "i_w": nrm(keys[5], (L, H, I)),
        "i_b": jnp.zeros((L, I), jnp.float32),
        "f_w": nrm(keys[6], (L, I, H)),
        "f_b": jnp.zeros((L, H), jnp.float32),
        "ln2_g": jnp.ones((L, H), jnp.float32),
        "ln2_b": jnp.zeros((L, H), jnp.float32),
        "pool_w": nrm(keys[7], (H, H)),
        "pool_b": jnp.zeros((H,), jnp.float32),
        "cls_w": nrm(keys[8], (H, cfg.num_labels)),
        "cls_b": jnp.zeros((cfg.num_labels,), jnp.float32),
    }


def bert_pair_forward(params, word, seg, mask, cfg):
    B, S = word.shape
    H = cfg.hidden_size
    nH = cfg.num_heads
    dH = H // nH
    L = cfg.num_layers
    I = cfg.intermediate_size
    NL = cfg.num_labels

    # Embedding gathers are glue (plain XLA); everything else runs in Pallas.
    emb = (params["word_emb"][word]
           + params["pos_emb"][jnp.arange(S)][None, :, :]
           + params["type_emb"][seg]).astype(jnp.float32)              # (B, S, H)
    # Extended attention mask: (1 - mask) * -10000, broadcast over queries.
    att_bias = ((1.0 - mask.astype(jnp.float32)) * -10000.0)[:, None, :]  # (B,1,S)

    kernel = functools.partial(
        _bert_encoder_kernel,
        num_layers=L, num_heads=nH, head_dim=dH,
        eps=1e-12, scale=1.0 / math.sqrt(dH))

    def full(shape):  # whole-array block, same block for every grid step
        nd = len(shape)
        return pl.BlockSpec(shape, lambda b, nd=nd: (0,) * nd)

    in_specs = [
        pl.BlockSpec((1, S, H), lambda b: (b, 0, 0)),   # emb
        pl.BlockSpec((1, 1, S), lambda b: (b, 0, 0)),   # attention bias
        full((1, H)), full((1, H)),                     # emb LN gamma/beta
        full((L, H, 3 * H)), full((L, 1, 3 * H)),       # fused QKV
        full((L, H, H)), full((L, 1, H)),               # attn output proj
        full((L, 1, H)), full((L, 1, H)),               # LN1
        full((L, H, I)), full((L, 1, I)),               # intermediate
        full((L, I, H)), full((L, 1, H)),               # FFN output
        full((L, 1, H)), full((L, 1, H)),               # LN2
        full((H, H)), full((1, H)),                     # pooler
        full((H, NL)), full((1, NL)),                   # classifier
    ]

    logits3 = pl.pallas_call(
        kernel,
        out_shape=jax.ShapeDtypeStruct((B, 1, NL), jnp.float32),
        grid=(B,),
        in_specs=in_specs,
        out_specs=pl.BlockSpec((1, 1, NL), lambda b: (b, 0, 0)),
        compiler_params=pltpu.CompilerParams(
            dimension_semantics=("parallel",)),   # one sequence per TC on v7x
    )(
        emb, att_bias,
        params["emb_ln_g"].reshape(1, H), params["emb_ln_b"].reshape(1, H),
        params["qkv_w"], params["qkv_b"].reshape(L, 1, 3 * H),
        params["o_w"], params["o_b"].reshape(L, 1, H),
        params["ln1_g"].reshape(L, 1, H), params["ln1_b"].reshape(L, 1, H),
        params["i_w"], params["i_b"].reshape(L, 1, I),
        params["f_w"], params["f_b"].reshape(L, 1, H),
        params["ln2_g"].reshape(L, 1, H), params["ln2_b"].reshape(L, 1, H),
        params["pool_w"], params["pool_b"].reshape(1, H),
        params["cls_w"], params["cls_b"].reshape(1, NL),
    )
    return logits3.reshape(B, NL)


# ----------------------------------- main ------------------------------------

if __name__ == "__main__":
    cfg = Config()
    B, S = 2, 8  # max_length = 8

    key = jax.random.PRNGKey(0)
    kp, kw, km = jax.random.split(key, 3)
    params = init_params(kp, cfg)

    word = jax.random.randint(kw, (B, S), 0, cfg.vocab_size, dtype=jnp.int32)
    # segment ids: first half sentence A (0), second half sentence B (1)
    seg = jnp.concatenate(
        [jnp.zeros((B, S // 2), jnp.int32), jnp.ones((B, S // 2), jnp.int32)],
        axis=1)
    # attention mask: last two tokens of batch element 1 are padding
    mask = jnp.ones((B, S), jnp.int32)
    mask = mask.at[1, -2:].set(0)

    logits = jax.jit(
        functools.partial(bert_pair_forward, cfg=cfg)
    )(params, word, seg, mask)
    logits = jax.block_until_ready(logits)
    assert logits.shape == (B, cfg.num_labels)
    assert logits.dtype == jnp.float32
    print("KERNEL_OK")
</pallas_src>

<mosaic_0001>
module attributes {stable_mosaic.version = 11 : i64} {
  func.func @_bert_encoder_kernel(%arg0: i32, %arg1: memref<1x8x32xf32, #tpu.memory_space<vmem>>, %arg2: memref<1x1x8xf32, #tpu.memory_space<vmem>>, %arg3: memref<1x32xf32, #tpu.memory_space<vmem>>, %arg4: memref<1x32xf32, #tpu.memory_space<vmem>>, %arg5: memref<2x32x96xf32, #tpu.memory_space<vmem>>, %arg6: memref<2x1x96xf32, #tpu.memory_space<vmem>>, %arg7: memref<2x32x32xf32, #tpu.memory_space<vmem>>, %arg8: memref<2x1x32xf32, #tpu.memory_space<vmem>>, %arg9: memref<2x1x32xf32, #tpu.memory_space<vmem>>, %arg10: memref<2x1x32xf32, #tpu.memory_space<vmem>>, %arg11: memref<2x32x64xf32, #tpu.memory_space<vmem>>, %arg12: memref<2x1x64xf32, #tpu.memory_space<vmem>>, %arg13: memref<2x64x32xf32, #tpu.memory_space<vmem>>, %arg14: memref<2x1x32xf32, #tpu.memory_space<vmem>>, %arg15: memref<2x1x32xf32, #tpu.memory_space<vmem>>, %arg16: memref<2x1x32xf32, #tpu.memory_space<vmem>>, %arg17: memref<32x32xf32, #tpu.memory_space<vmem>>, %arg18: memref<1x32xf32, #tpu.memory_space<vmem>>, %arg19: memref<32x2xf32, #tpu.memory_space<vmem>>, %arg20: memref<1x2xf32, #tpu.memory_space<vmem>>, %arg21: memref<1x1x2xf32, #tpu.memory_space<vmem>>) attributes {dimension_semantics = [#tpu.dimension_semantics<parallel>], iteration_bounds = array<i64: 2>, scalar_prefetch = 0 : i64, scratch_operands = 0 : i64, tpu.core_type = #tpu.core_type<tc>, window_params = [{transform_indices = @transform_0, window_bounds = array<i64: 1, 8, 32>}, {transform_indices = @transform_1, window_bounds = array<i64: 1, 1, 8>}, {pipeline_mode = #tpu.pipeline_mode<synchronous>, transform_indices = @transform_2, window_bounds = array<i64: 1, 32>}, {pipeline_mode = #tpu.pipeline_mode<synchronous>, transform_indices = @transform_3, window_bounds = array<i64: 1, 32>}, {pipeline_mode = #tpu.pipeline_mode<synchronous>, transform_indices = @transform_4, window_bounds = array<i64: 2, 32, 96>}, {pipeline_mode = #tpu.pipeline_mode<synchronous>, transform_indices = @transform_5, window_bounds = array<i64: 2, 1, 96>}, {pipeline_mode = #tpu.pipeline_mode<synchronous>, transform_indices = @transform_6, window_bounds = array<i64: 2, 32, 32>}, {pipeline_mode = #tpu.pipeline_mode<synchronous>, transform_indices = @transform_7, window_bounds = array<i64: 2, 1, 32>}, {pipeline_mode = #tpu.pipeline_mode<synchronous>, transform_indices = @transform_8, window_bounds = array<i64: 2, 1, 32>}, {pipeline_mode = #tpu.pipeline_mode<synchronous>, transform_indices = @transform_9, window_bounds = array<i64: 2, 1, 32>}, {pipeline_mode = #tpu.pipeline_mode<synchronous>, transform_indices = @transform_10, window_bounds = array<i64: 2, 32, 64>}, {pipeline_mode = #tpu.pipeline_mode<synchronous>, transform_indices = @transform_11, window_bounds = array<i64: 2, 1, 64>}, {pipeline_mode = #tpu.pipeline_mode<synchronous>, transform_indices = @transform_12, window_bounds = array<i64: 2, 64, 32>}, {pipeline_mode = #tpu.pipeline_mode<synchronous>, transform_indices = @transform_13, window_bounds = array<i64: 2, 1, 32>}, {pipeline_mode = #tpu.pipeline_mode<synchronous>, transform_indices = @transform_14, window_bounds = array<i64: 2, 1, 32>}, {pipeline_mode = #tpu.pipeline_mode<synchronous>, transform_indices = @transform_15, window_bounds = array<i64: 2, 1, 32>}, {pipeline_mode = #tpu.pipeline_mode<synchronous>, transform_indices = @transform_16, window_bounds = array<i64: 32, 32>}, {pipeline_mode = #tpu.pipeline_mode<synchronous>, transform_indices = @transform_17, window_bounds = array<i64: 1, 32>}, {pipeline_mode = #tpu.pipeline_mode<synchronous>, transform_indices = @transform_18, window_bounds = array<i64: 32, 2>}, {pipeline_mode = #tpu.pipeline_mode<synchronous>, transform_indices = @transform_19, window_bounds = array<i64: 1, 2>}, {transform_indices = @transform_20, window_bounds = array<i64: 1, 1, 2>}]} {
    %c0 = arith.constant 0 : index
    %c0_0 = arith.constant 0 : index
    %c0_1 = arith.constant 0 : index
    %0 = vector.load %arg1[%c0, %c0_0, %c0_1] : memref<1x8x32xf32, #tpu.memory_space<vmem>>, vector<1x8x32xf32>
    %1 = vector.shape_cast %0 : vector<1x8x32xf32> to vector<8x32xf32>
    %c0_2 = arith.constant 0 : index
    %c0_3 = arith.constant 0 : index
    %2 = vector.load %arg3[%c0_2, %c0_3] : memref<1x32xf32, #tpu.memory_space<vmem>>, vector<1x32xf32>
    %c0_4 = arith.constant 0 : index
    %c0_5 = arith.constant 0 : index
    %3 = vector.load %arg4[%c0_4, %c0_5] : memref<1x32xf32, #tpu.memory_space<vmem>>, vector<1x32xf32>
    %cst = arith.constant dense<0.000000e+00> : vector<8xf32>
    %4 = vector.multi_reduction <add>, %1, %cst [1] : vector<8x32xf32> to vector<8xf32>
    %5 = vector.shape_cast %4 : vector<8xf32> to vector<8x1xf32>
    %cst_6 = arith.constant 3.200000e+01 : f32
    %6 = vector.broadcast %cst_6 : f32 to vector<8x1xf32>
    %7 = arith.divf %5, %6 : vector<8x1xf32>
    %8 = vector.broadcast %7 : vector<8x1xf32> to vector<8x32xf32>
    %9 = arith.subf %1, %8 : vector<8x32xf32>
    %10 = vector.broadcast %7 : vector<8x1xf32> to vector<8x32xf32>
    %11 = arith.subf %1, %10 : vector<8x32xf32>
    %12 = arith.mulf %9, %11 : vector<8x32xf32>
    %cst_7 = arith.constant dense<0.000000e+00> : vector<8xf32>
    %13 = vector.multi_reduction <add>, %12, %cst_7 [1] : vector<8x32xf32> to vector<8xf32>
    %14 = vector.shape_cast %13 : vector<8xf32> to vector<8x1xf32>
    %cst_8 = arith.constant 3.200000e+01 : f32
    %15 = vector.broadcast %cst_8 : f32 to vector<8x1xf32>
    %16 = arith.divf %14, %15 : vector<8x1xf32>
    %17 = vector.broadcast %7 : vector<8x1xf32> to vector<8x32xf32>
    %18 = arith.subf %1, %17 : vector<8x32xf32>
    %cst_9 = arith.constant 9.99999996E-13 : f32
    %19 = vector.broadcast %cst_9 : f32 to vector<8x1xf32>
    %20 = arith.addf %16, %19 : vector<8x1xf32>
    %21 = math.rsqrt %20 : vector<8x1xf32>
    %22 = vector.broadcast %21 : vector<8x1xf32> to vector<8x32xf32>
    %23 = arith.mulf %18, %22 : vector<8x32xf32>
    %24 = vector.broadcast %2 : vector<1x32xf32> to vector<8x32xf32>
    %25 = arith.mulf %23, %24 : vector<8x32xf32>
    %26 = vector.broadcast %3 : vector<1x32xf32> to vector<8x32xf32>
    %27 = arith.addf %25, %26 : vector<8x32xf32>
    %c0_10 = arith.constant 0 : index
    %c0_11 = arith.constant 0 : index
    %c0_12 = arith.constant 0 : index
    %28 = vector.load %arg2[%c0_10, %c0_11, %c0_12] : memref<1x1x8xf32, #tpu.memory_space<vmem>>, vector<1x1x8xf32>
    %29 = vector.shape_cast %28 : vector<1x1x8xf32> to vector<1x8xf32>
    %c0_13 = arith.constant 0 : index
    %c0_14 = arith.constant 0 : index
    %c0_15 = arith.constant 0 : index
    %30 = vector.load %arg5[%c0_13, %c0_14, %c0_15] : memref<2x32x96xf32, #tpu.memory_space<vmem>>, vector<1x32x96xf32>
    %31 = vector.shape_cast %30 : vector<1x32x96xf32> to vector<32x96xf32>
    %cst_16 = arith.constant dense<0.000000e+00> : vector<8x96xf32>
    %32 = tpu.matmul %27, %31, %cst_16 {dimension_numbers = #tpu.dot_dimension_numbers<[1], [0], [0], [1], [0, 0, 1, 1], [], []>} : vector<8x32xf32>, vector<32x96xf32>, vector<8x96xf32> -> vector<8x96xf32>
    %c0_17 = arith.constant 0 : index
    %c0_18 = arith.constant 0 : index
    %c0_19 = arith.constant 0 : index
    %33 = vector.load %arg6[%c0_17, %c0_18, %c0_19] : memref<2x1x96xf32, #tpu.memory_space<vmem>>, vector<1x1x96xf32>
    %34 = vector.shape_cast %33 : vector<1x1x96xf32> to vector<1x96xf32>
    %35 = vector.broadcast %34 : vector<1x96xf32> to vector<8x96xf32>
    %36 = arith.addf %32, %35 : vector<8x96xf32>
    %37 = vector.extract_strided_slice %36 {offsets = [0, 0], sizes = [8, 16], strides = [1, 1]} : vector<8x96xf32> to vector<8x16xf32>
    %38 = vector.extract_strided_slice %36 {offsets = [0, 32], sizes = [8, 16], strides = [1, 1]} : vector<8x96xf32> to vector<8x16xf32>
    %39 = vector.extract_strided_slice %36 {offsets = [0, 64], sizes = [8, 16], strides = [1, 1]} : vector<8x96xf32> to vector<8x16xf32>
    %cst_20 = arith.constant dense<0.000000e+00> : vector<8x8xf32>
    %40 = tpu.matmul %37, %38, %cst_20 {dimension_numbers = #tpu.dot_dimension_numbers<[1], [1], [0], [0], [0, 0, 1, 0], [], []>} : vector<8x16xf32>, vector<8x16xf32>, vector<8x8xf32> -> vector<8x8xf32>
    %cst_21 = arith.constant 2.500000e-01 : f32
    %41 = vector.broadcast %cst_21 : f32 to vector<8x8xf32>
    %42 = arith.mulf %40, %41 : vector<8x8xf32>
    %43 = vector.broadcast %29 : vector<1x8xf32> to vector<8x8xf32>
    %44 = arith.addf %42, %43 : vector<8x8xf32>
    %cst_22 = arith.constant dense<0xFF800000> : vector<8xf32>
    %45 = vector.multi_reduction <maximumf>, %44, %cst_22 [1] : vector<8x8xf32> to vector<8xf32>
    %46 = vector.shape_cast %45 : vector<8xf32> to vector<8x1xf32>
    %47 = vector.broadcast %46 : vector<8x1xf32> to vector<8x8xf32>
    %48 = arith.subf %44, %47 : vector<8x8xf32>
    %49 = math.exp %48 : vector<8x8xf32>
    %cst_23 = arith.constant dense<0.000000e+00> : vector<8xf32>
    %50 = vector.multi_reduction <add>, %49, %cst_23 [1] : vector<8x8xf32> to vector<8xf32>
    %51 = vector.shape_cast %50 : vector<8xf32> to vector<8x1xf32>
    %52 = tpu.reciprocal %51 {approx = true} : vector<8x1xf32> -> vector<8x1xf32>
    %53 = vector.broadcast %52 : vector<8x1xf32> to vector<8x8xf32>
    %54 = arith.mulf %49, %53 : vector<8x8xf32>
    %cst_24 = arith.constant dense<0.000000e+00> : vector<8x16xf32>
    %55 = tpu.matmul %54, %39, %cst_24 {dimension_numbers = #tpu.dot_dimension_numbers<[1], [0], [0], [1], [0, 0, 1, 1], [], []>} : vector<8x8xf32>, vector<8x16xf32>, vector<8x16xf32> -> vector<8x16xf32>
    %56 = vector.extract_strided_slice %36 {offsets = [0, 16], sizes = [8, 16], strides = [1, 1]} : vector<8x96xf32> to vector<8x16xf32>
    %57 = vector.extract_strided_slice %36 {offsets = [0, 48], sizes = [8, 16], strides = [1, 1]} : vector<8x96xf32> to vector<8x16xf32>
    %58 = vector.extract_strided_slice %36 {offsets = [0, 80], sizes = [8, 16], strides = [1, 1]} : vector<8x96xf32> to vector<8x16xf32>
    %cst_25 = arith.constant dense<0.000000e+00> : vector<8x8xf32>
    %59 = tpu.matmul %56, %57, %cst_25 {dimension_numbers = #tpu.dot_dimension_numbers<[1], [1], [0], [0], [0, 0, 1, 0], [], []>} : vector<8x16xf32>, vector<8x16xf32>, vector<8x8xf32> -> vector<8x8xf32>
    %cst_26 = arith.constant 2.500000e-01 : f32
    %60 = vector.broadcast %cst_26 : f32 to vector<8x8xf32>
    %61 = arith.mulf %59, %60 : vector<8x8xf32>
    %62 = vector.broadcast %29 : vector<1x8xf32> to vector<8x8xf32>
    %63 = arith.addf %61, %62 : vector<8x8xf32>
    %cst_27 = arith.constant dense<0xFF800000> : vector<8xf32>
    %64 = vector.multi_reduction <maximumf>, %63, %cst_27 [1] : vector<8x8xf32> to vector<8xf32>
    %65 = vector.shape_cast %64 : vector<8xf32> to vector<8x1xf32>
    %66 = vector.broadcast %65 : vector<8x1xf32> to vector<8x8xf32>
    %67 = arith.subf %63, %66 : vector<8x8xf32>
    %68 = math.exp %67 : vector<8x8xf32>
    %cst_28 = arith.constant dense<0.000000e+00> : vector<8xf32>
    %69 = vector.multi_reduction <add>, %68, %cst_28 [1] : vector<8x8xf32> to vector<8xf32>
    %70 = vector.shape_cast %69 : vector<8xf32> to vector<8x1xf32>
    %71 = tpu.reciprocal %70 {approx = true} : vector<8x1xf32> -> vector<8x1xf32>
    %72 = vector.broadcast %71 : vector<8x1xf32> to vector<8x8xf32>
    %73 = arith.mulf %68, %72 : vector<8x8xf32>
    %cst_29 = arith.constant dense<0.000000e+00> : vector<8x16xf32>
    %74 = tpu.matmul %73, %58, %cst_29 {dimension_numbers = #tpu.dot_dimension_numbers<[1], [0], [0], [1], [0, 0, 1, 1], [], []>} : vector<8x8xf32>, vector<8x16xf32>, vector<8x16xf32> -> vector<8x16xf32>
    %75 = tpu.concatenate %55, %74 in 1 : vector<8x16xf32>, vector<8x16xf32> -> vector<8x32xf32>
    %c0_30 = arith.constant 0 : index
    %c0_31 = arith.constant 0 : index
    %c0_32 = arith.constant 0 : index
    %76 = vector.load %arg7[%c0_30, %c0_31, %c0_32] : memref<2x32x32xf32, #tpu.memory_space<vmem>>, vector<1x32x32xf32>
    %77 = vector.shape_cast %76 : vector<1x32x32xf32> to vector<32x32xf32>
    %cst_33 = arith.constant dense<0.000000e+00> : vector<8x32xf32>
    %78 = tpu.matmul %75, %77, %cst_33 {dimension_numbers = #tpu.dot_dimension_numbers<[1], [0], [0], [1], [0, 0, 1, 1], [], []>} : vector<8x32xf32>, vector<32x32xf32>, vector<8x32xf32> -> vector<8x32xf32>
    %c0_34 = arith.constant 0 : index
    %c0_35 = arith.constant 0 : index
    %c0_36 = arith.constant 0 : index
    %79 = vector.load %arg8[%c0_34, %c0_35, %c0_36] : memref<2x1x32xf32, #tpu.memory_space<vmem>>, vector<1x1x32xf32>
    %80 = vector.shape_cast %79 : vector<1x1x32xf32> to vector<1x32xf32>
    %81 = vector.broadcast %80 : vector<1x32xf32> to vector<8x32xf32>
    %82 = arith.addf %78, %81 : vector<8x32xf32>
    %83 = arith.addf %82, %27 : vector<8x32xf32>
    %c0_37 = arith.constant 0 : index
    %c0_38 = arith.constant 0 : index
    %c0_39 = arith.constant 0 : index
    %84 = vector.load %arg9[%c0_37, %c0_38, %c0_39] : memref<2x1x32xf32, #tpu.memory_space<vmem>>, vector<1x1x32xf32>
    %85 = vector.shape_cast %84 : vector<1x1x32xf32> to vector<1x32xf32>
    %c0_40 = arith.constant 0 : index
    %c0_41 = arith.constant 0 : index
    %c0_42 = arith.constant 0 : index
    %86 = vector.load %arg10[%c0_40, %c0_41, %c0_42] : memref<2x1x32xf32, #tpu.memory_space<vmem>>, vector<1x1x32xf32>
    %87 = vector.shape_cast %86 : vector<1x1x32xf32> to vector<1x32xf32>
    %cst_43 = arith.constant dense<0.000000e+00> : vector<8xf32>
    %88 = vector.multi_reduction <add>, %83, %cst_43 [1] : vector<8x32xf32> to vector<8xf32>
    %89 = vector.shape_cast %88 : vector<8xf32> to vector<8x1xf32>
    %cst_44 = arith.constant 3.200000e+01 : f32
    %90 = vector.broadcast %cst_44 : f32 to vector<8x1xf32>
    %91 = arith.divf %89, %90 : vector<8x1xf32>
    %92 = vector.broadcast %91 : vector<8x1xf32> to vector<8x32xf32>
    %93 = arith.subf %83, %92 : vector<8x32xf32>
    %94 = vector.broadcast %91 : vector<8x1xf32> to vector<8x32xf32>
    %95 = arith.subf %83, %94 : vector<8x32xf32>
    %96 = arith.mulf %93, %95 : vector<8x32xf32>
    %cst_45 = arith.constant dense<0.000000e+00> : vector<8xf32>
    %97 = vector.multi_reduction <add>, %96, %cst_45 [1] : vector<8x32xf32> to vector<8xf32>
    %98 = vector.shape_cast %97 : vector<8xf32> to vector<8x1xf32>
    %cst_46 = arith.constant 3.200000e+01 : f32
    %99 = vector.broadcast %cst_46 : f32 to vector<8x1xf32>
    %100 = arith.divf %98, %99 : vector<8x1xf32>
    %101 = vector.broadcast %91 : vector<8x1xf32> to vector<8x32xf32>
    %102 = arith.subf %83, %101 : vector<8x32xf32>
    %cst_47 = arith.constant 9.99999996E-13 : f32
    %103 = vector.broadcast %cst_47 : f32 to vector<8x1xf32>
    %104 = arith.addf %100, %103 : vector<8x1xf32>
    %105 = math.rsqrt %104 : vector<8x1xf32>
    %106 = vector.broadcast %105 : vector<8x1xf32> to vector<8x32xf32>
    %107 = arith.mulf %102, %106 : vector<8x32xf32>
    %108 = vector.broadcast %85 : vector<1x32xf32> to vector<8x32xf32>
    %109 = arith.mulf %107, %108 : vector<8x32xf32>
    %110 = vector.broadcast %87 : vector<1x32xf32> to vector<8x32xf32>
    %111 = arith.addf %109, %110 : vector<8x32xf32>
    %c0_48 = arith.constant 0 : index
    %c0_49 = arith.constant 0 : index
    %c0_50 = arith.constant 0 : index
    %112 = vector.load %arg11[%c0_48, %c0_49, %c0_50] : memref<2x32x64xf32, #tpu.memory_space<vmem>>, vector<1x32x64xf32>
    %113 = vector.shape_cast %112 : vector<1x32x64xf32> to vector<32x64xf32>
    %cst_51 = arith.constant dense<0.000000e+00> : vector<8x64xf32>
    %114 = tpu.matmul %111, %113, %cst_51 {dimension_numbers = #tpu.dot_dimension_numbers<[1], [0], [0], [1], [0, 0, 1, 1], [], []>} : vector<8x32xf32>, vector<32x64xf32>, vector<8x64xf32> -> vector<8x64xf32>
    %c0_52 = arith.constant 0 : index
    %c0_53 = arith.constant 0 : index
    %c0_54 = arith.constant 0 : index
    %115 = vector.load %arg12[%c0_52, %c0_53, %c0_54] : memref<2x1x64xf32, #tpu.memory_space<vmem>>, vector<1x1x64xf32>
    %116 = vector.shape_cast %115 : vector<1x1x64xf32> to vector<1x64xf32>
    %117 = vector.broadcast %116 : vector<1x64xf32> to vector<8x64xf32>
    %118 = arith.addf %114, %117 : vector<8x64xf32>
    %cst_55 = arith.constant 5.000000e-01 : f32
    %119 = vector.broadcast %cst_55 : f32 to vector<8x64xf32>
    %120 = arith.mulf %119, %118 : vector<8x64xf32>
    %cst_56 = arith.constant 4.471500e-02 : f32
    %121 = vector.broadcast %cst_56 : f32 to vector<8x64xf32>
    %122 = arith.mulf %121, %118 : vector<8x64xf32>
    %123 = arith.mulf %122, %118 : vector<8x64xf32>
    %124 = arith.mulf %123, %118 : vector<8x64xf32>
    %125 = arith.addf %118, %124 : vector<8x64xf32>
    %cst_57 = arith.constant 0.797884583 : f32
    %126 = vector.broadcast %cst_57 : f32 to vector<8x64xf32>
    %127 = arith.mulf %126, %125 : vector<8x64xf32>
    %128 = math.tanh %127 : vector<8x64xf32>
    %cst_58 = arith.constant 1.000000e+00 : f32
    %129 = vector.broadcast %cst_58 : f32 to vector<8x64xf32>
    %130 = arith.addf %129, %128 : vector<8x64xf32>
    %131 = arith.mulf %120, %130 : vector<8x64xf32>
    %c0_59 = arith.constant 0 : index
    %c0_60 = arith.constant 0 : index
    %c0_61 = arith.constant 0 : index
    %132 = vector.load %arg13[%c0_59, %c0_60, %c0_61] : memref<2x64x32xf32, #tpu.memory_space<vmem>>, vector<1x64x32xf32>
    %133 = vector.shape_cast %132 : vector<1x64x32xf32> to vector<64x32xf32>
    %cst_62 = arith.constant dense<0.000000e+00> : vector<8x32xf32>
    %134 = tpu.matmul %131, %133, %cst_62 {dimension_numbers = #tpu.dot_dimension_numbers<[1], [0], [0], [1], [0, 0, 1, 1], [], []>} : vector<8x64xf32>, vector<64x32xf32>, vector<8x32xf32> -> vector<8x32xf32>
    %c0_63 = arith.constant 0 : index
    %c0_64 = arith.constant 0 : index
    %c0_65 = arith.constant 0 : index
    %135 = vector.load %arg14[%c0_63, %c0_64, %c0_65] : memref<2x1x32xf32, #tpu.memory_space<vmem>>, vector<1x1x32xf32>
    %136 = vector.shape_cast %135 : vector<1x1x32xf32> to vector<1x32xf32>
    %137 = vector.broadcast %136 : vector<1x32xf32> to vector<8x32xf32>
    %138 = arith.addf %134, %137 : vector<8x32xf32>
    %139 = arith.addf %138, %111 : vector<8x32xf32>
    %c0_66 = arith.constant 0 : index
    %c0_67 = arith.constant 0 : index
    %c0_68 = arith.constant 0 : index
    %140 = vector.load %arg15[%c0_66, %c0_67, %c0_68] : memref<2x1x32xf32, #tpu.memory_space<vmem>>, vector<1x1x32xf32>
    %141 = vector.shape_cast %140 : vector<1x1x32xf32> to vector<1x32xf32>
    %c0_69 = arith.constant 0 : index
    %c0_70 = arith.constant 0 : index
    %c0_71 = arith.constant 0 : index
    %142 = vector.load %arg16[%c0_69, %c0_70, %c0_71] : memref<2x1x32xf32, #tpu.memory_space<vmem>>, vector<1x1x32xf32>
    %143 = vector.shape_cast %142 : vector<1x1x32xf32> to vector<1x32xf32>
    %cst_72 = arith.constant dense<0.000000e+00> : vector<8xf32>
    %144 = vector.multi_reduction <add>, %139, %cst_72 [1] : vector<8x32xf32> to vector<8xf32>
    %145 = vector.shape_cast %144 : vector<8xf32> to vector<8x1xf32>
    %cst_73 = arith.constant 3.200000e+01 : f32
    %146 = vector.broadcast %cst_73 : f32 to vector<8x1xf32>
    %147 = arith.divf %145, %146 : vector<8x1xf32>
    %148 = vector.broadcast %147 : vector<8x1xf32> to vector<8x32xf32>
    %149 = arith.subf %139, %148 : vector<8x32xf32>
    %150 = vector.broadcast %147 : vector<8x1xf32> to vector<8x32xf32>
    %151 = arith.subf %139, %150 : vector<8x32xf32>
    %152 = arith.mulf %149, %151 : vector<8x32xf32>
    %cst_74 = arith.constant dense<0.000000e+00> : vector<8xf32>
    %153 = vector.multi_reduction <add>, %152, %cst_74 [1] : vector<8x32xf32> to vector<8xf32>
    %154 = vector.shape_cast %153 : vector<8xf32> to vector<8x1xf32>
    %cst_75 = arith.constant 3.200000e+01 : f32
    %155 = vector.broadcast %cst_75 : f32 to vector<8x1xf32>
    %156 = arith.divf %154, %155 : vector<8x1xf32>
    %157 = vector.broadcast %147 : vector<8x1xf32> to vector<8x32xf32>
    %158 = arith.subf %139, %157 : vector<8x32xf32>
    %cst_76 = arith.constant 9.99999996E-13 : f32
    %159 = vector.broadcast %cst_76 : f32 to vector<8x1xf32>
    %160 = arith.addf %156, %159 : vector<8x1xf32>
    %161 = math.rsqrt %160 : vector<8x1xf32>
    %162 = vector.broadcast %161 : vector<8x1xf32> to vector<8x32xf32>
    %163 = arith.mulf %158, %162 : vector<8x32xf32>
    %164 = vector.broadcast %141 : vector<1x32xf32> to vector<8x32xf32>
    %165 = arith.mulf %163, %164 : vector<8x32xf32>
    %166 = vector.broadcast %143 : vector<1x32xf32> to vector<8x32xf32>
    %167 = arith.addf %165, %166 : vector<8x32xf32>
    %c1 = arith.constant 1 : index
    %c0_77 = arith.constant 0 : index
    %c0_78 = arith.constant 0 : index
    %168 = vector.load %arg5[%c1, %c0_77, %c0_78] : memref<2x32x96xf32, #tpu.memory_space<vmem>>, vector<1x32x96xf32>
    %169 = vector.shape_cast %168 : vector<1x32x96xf32> to vector<32x96xf32>
    %cst_79 = arith.constant dense<0.000000e+00> : vector<8x96xf32>
    %170 = tpu.matmul %167, %169, %cst_79 {dimension_numbers = #tpu.dot_dimension_numbers<[1], [0], [0], [1], [0, 0, 1, 1], [], []>} : vector<8x32xf32>, vector<32x96xf32>, vector<8x96xf32> -> vector<8x96xf32>
    %c1_80 = arith.constant 1 : index
    %c0_81 = arith.constant 0 : index
    %c0_82 = arith.constant 0 : index
    %171 = vector.load %arg6[%c1_80, %c0_81, %c0_82] : memref<2x1x96xf32, #tpu.memory_space<vmem>>, vector<1x1x96xf32>
    %172 = vector.shape_cast %171 : vector<1x1x96xf32> to vector<1x96xf32>
    %173 = vector.broadcast %172 : vector<1x96xf32> to vector<8x96xf32>
    %174 = arith.addf %170, %173 : vector<8x96xf32>
    %175 = vector.extract_strided_slice %174 {offsets = [0, 0], sizes = [8, 16], strides = [1, 1]} : vector<8x96xf32> to vector<8x16xf32>
    %176 = vector.extract_strided_slice %174 {offsets = [0, 32], sizes = [8, 16], strides = [1, 1]} : vector<8x96xf32> to vector<8x16xf32>
    %177 = vector.extract_strided_slice %174 {offsets = [0, 64], sizes = [8, 16], strides = [1, 1]} : vector<8x96xf32> to vector<8x16xf32>
    %cst_83 = arith.constant dense<0.000000e+00> : vector<8x8xf32>
    %178 = tpu.matmul %175, %176, %cst_83 {dimension_numbers = #tpu.dot_dimension_numbers<[1], [1], [0], [0], [0, 0, 1, 0], [], []>} : vector<8x16xf32>, vector<8x16xf32>, vector<8x8xf32> -> vector<8x8xf32>
    %cst_84 = arith.constant 2.500000e-01 : f32
    %179 = vector.broadcast %cst_84 : f32 to vector<8x8xf32>
    %180 = arith.mulf %178, %179 : vector<8x8xf32>
    %181 = vector.broadcast %29 : vector<1x8xf32> to vector<8x8xf32>
    %182 = arith.addf %180, %181 : vector<8x8xf32>
    %cst_85 = arith.constant dense<0xFF800000> : vector<8xf32>
    %183 = vector.multi_reduction <maximumf>, %182, %cst_85 [1] : vector<8x8xf32> to vector<8xf32>
    %184 = vector.shape_cast %183 : vector<8xf32> to vector<8x1xf32>
    %185 = vector.broadcast %184 : vector<8x1xf32> to vector<8x8xf32>
    %186 = arith.subf %182, %185 : vector<8x8xf32>
    %187 = math.exp %186 : vector<8x8xf32>
    %cst_86 = arith.constant dense<0.000000e+00> : vector<8xf32>
    %188 = vector.multi_reduction <add>, %187, %cst_86 [1] : vector<8x8xf32> to vector<8xf32>
    %189 = vector.shape_cast %188 : vector<8xf32> to vector<8x1xf32>
    %190 = tpu.reciprocal %189 {approx = true} : vector<8x1xf32> -> vector<8x1xf32>
    %191 = vector.broadcast %190 : vector<8x1xf32> to vector<8x8xf32>
    %192 = arith.mulf %187, %191 : vector<8x8xf32>
    %cst_87 = arith.constant dense<0.000000e+00> : vector<8x16xf32>
    %193 = tpu.matmul %192, %177, %cst_87 {dimension_numbers = #tpu.dot_dimension_numbers<[1], [0], [0], [1], [0, 0, 1, 1], [], []>} : vector<8x8xf32>, vector<8x16xf32>, vector<8x16xf32> -> vector<8x16xf32>
    %194 = vector.extract_strided_slice %174 {offsets = [0, 16], sizes = [8, 16], strides = [1, 1]} : vector<8x96xf32> to vector<8x16xf32>
    %195 = vector.extract_strided_slice %174 {offsets = [0, 48], sizes = [8, 16], strides = [1, 1]} : vector<8x96xf32> to vector<8x16xf32>
    %196 = vector.extract_strided_slice %174 {offsets = [0, 80], sizes = [8, 16], strides = [1, 1]} : vector<8x96xf32> to vector<8x16xf32>
    %cst_88 = arith.constant dense<0.000000e+00> : vector<8x8xf32>
    %197 = tpu.matmul %194, %195, %cst_88 {dimension_numbers = #tpu.dot_dimension_numbers<[1], [1], [0], [0], [0, 0, 1, 0], [], []>} : vector<8x16xf32>, vector<8x16xf32>, vector<8x8xf32> -> vector<8x8xf32>
    %cst_89 = arith.constant 2.500000e-01 : f32
    %198 = vector.broadcast %cst_89 : f32 to vector<8x8xf32>
    %199 = arith.mulf %197, %198 : vector<8x8xf32>
    %200 = vector.broadcast %29 : vector<1x8xf32> to vector<8x8xf32>
    %201 = arith.addf %199, %200 : vector<8x8xf32>
    %cst_90 = arith.constant dense<0xFF800000> : vector<8xf32>
    %202 = vector.multi_reduction <maximumf>, %201, %cst_90 [1] : vector<8x8xf32> to vector<8xf32>
    %203 = vector.shape_cast %202 : vector<8xf32> to vector<8x1xf32>
    %204 = vector.broadcast %203 : vector<8x1xf32> to vector<8x8xf32>
    %205 = arith.subf %201, %204 : vector<8x8xf32>
    %206 = math.exp %205 : vector<8x8xf32>
    %cst_91 = arith.constant dense<0.000000e+00> : vector<8xf32>
    %207 = vector.multi_reduction <add>, %206, %cst_91 [1] : vector<8x8xf32> to vector<8xf32>
    %208 = vector.shape_cast %207 : vector<8xf32> to vector<8x1xf32>
    %209 = tpu.reciprocal %208 {approx = true} : vector<8x1xf32> -> vector<8x1xf32>
    %210 = vector.broadcast %209 : vector<8x1xf32> to vector<8x8xf32>
    %211 = arith.mulf %206, %210 : vector<8x8xf32>
    %cst_92 = arith.constant dense<0.000000e+00> : vector<8x16xf32>
    %212 = tpu.matmul %211, %196, %cst_92 {dimension_numbers = #tpu.dot_dimension_numbers<[1], [0], [0], [1], [0, 0, 1, 1], [], []>} : vector<8x8xf32>, vector<8x16xf32>, vector<8x16xf32> -> vector<8x16xf32>
    %213 = tpu.concatenate %193, %212 in 1 : vector<8x16xf32>, vector<8x16xf32> -> vector<8x32xf32>
    %c1_93 = arith.constant 1 : index
    %c0_94 = arith.constant 0 : index
    %c0_95 = arith.constant 0 : index
    %214 = vector.load %arg7[%c1_93, %c0_94, %c0_95] : memref<2x32x32xf32, #tpu.memory_space<vmem>>, vector<1x32x32xf32>
    %215 = vector.shape_cast %214 : vector<1x32x32xf32> to vector<32x32xf32>
    %cst_96 = arith.constant dense<0.000000e+00> : vector<8x32xf32>
    %216 = tpu.matmul %213, %215, %cst_96 {dimension_numbers = #tpu.dot_dimension_numbers<[1], [0], [0], [1], [0, 0, 1, 1], [], []>} : vector<8x32xf32>, vector<32x32xf32>, vector<8x32xf32> -> vector<8x32xf32>
    %c1_97 = arith.constant 1 : index
    %c0_98 = arith.constant 0 : index
    %c0_99 = arith.constant 0 : index
    %217 = vector.load %arg8[%c1_97, %c0_98, %c0_99] : memref<2x1x32xf32, #tpu.memory_space<vmem>>, vector<1x1x32xf32>
    %218 = vector.shape_cast %217 : vector<1x1x32xf32> to vector<1x32xf32>
    %219 = vector.broadcast %218 : vector<1x32xf32> to vector<8x32xf32>
    %220 = arith.addf %216, %219 : vector<8x32xf32>
    %221 = arith.addf %220, %167 : vector<8x32xf32>
    %c1_100 = arith.constant 1 : index
    %c0_101 = arith.constant 0 : index
    %c0_102 = arith.constant 0 : index
    %222 = vector.load %arg9[%c1_100, %c0_101, %c0_102] : memref<2x1x32xf32, #tpu.memory_space<vmem>>, vector<1x1x32xf32>
    %223 = vector.shape_cast %222 : vector<1x1x32xf32> to vector<1x32xf32>
    %c1_103 = arith.constant 1 : index
    %c0_104 = arith.constant 0 : index
    %c0_105 = arith.constant 0 : index
    %224 = vector.load %arg10[%c1_103, %c0_104, %c0_105] : memref<2x1x32xf32, #tpu.memory_space<vmem>>, vector<1x1x32xf32>
    %225 = vector.shape_cast %224 : vector<1x1x32xf32> to vector<1x32xf32>
    %cst_106 = arith.constant dense<0.000000e+00> : vector<8xf32>
    %226 = vector.multi_reduction <add>, %221, %cst_106 [1] : vector<8x32xf32> to vector<8xf32>
    %227 = vector.shape_cast %226 : vector<8xf32> to vector<8x1xf32>
    %cst_107 = arith.constant 3.200000e+01 : f32
    %228 = vector.broadcast %cst_107 : f32 to vector<8x1xf32>
    %229 = arith.divf %227, %228 : vector<8x1xf32>
    %230 = vector.broadcast %229 : vector<8x1xf32> to vector<8x32xf32>
    %231 = arith.subf %221, %230 : vector<8x32xf32>
    %232 = vector.broadcast %229 : vector<8x1xf32> to vector<8x32xf32>
    %233 = arith.subf %221, %232 : vector<8x32xf32>
    %234 = arith.mulf %231, %233 : vector<8x32xf32>
    %cst_108 = arith.constant dense<0.000000e+00> : vector<8xf32>
    %235 = vector.multi_reduction <add>, %234, %cst_108 [1] : vector<8x32xf32> to vector<8xf32>
    %236 = vector.shape_cast %235 : vector<8xf32> to vector<8x1xf32>
    %cst_109 = arith.constant 3.200000e+01 : f32
    %237 = vector.broadcast %cst_109 : f32 to vector<8x1xf32>
    %238 = arith.divf %236, %237 : vector<8x1xf32>
    %239 = vector.broadcast %229 : vector<8x1xf32> to vector<8x32xf32>
    %240 = arith.subf %221, %239 : vector<8x32xf32>
    %cst_110 = arith.constant 9.99999996E-13 : f32
    %241 = vector.broadcast %cst_110 : f32 to vector<8x1xf32>
    %242 = arith.addf %238, %241 : vector<8x1xf32>
    %243 = math.rsqrt %242 : vector<8x1xf32>
    %244 = vector.broadcast %243 : vector<8x1xf32> to vector<8x32xf32>
    %245 = arith.mulf %240, %244 : vector<8x32xf32>
    %246 = vector.broadcast %223 : vector<1x32xf32> to vector<8x32xf32>
    %247 = arith.mulf %245, %246 : vector<8x32xf32>
    %248 = vector.broadcast %225 : vector<1x32xf32> to vector<8x32xf32>
    %249 = arith.addf %247, %248 : vector<8x32xf32>
    %c1_111 = arith.constant 1 : index
    %c0_112 = arith.constant 0 : index
    %c0_113 = arith.constant 0 : index
    %250 = vector.load %arg11[%c1_111, %c0_112, %c0_113] : memref<2x32x64xf32, #tpu.memory_space<vmem>>, vector<1x32x64xf32>
    %251 = vector.shape_cast %250 : vector<1x32x64xf32> to vector<32x64xf32>
    %cst_114 = arith.constant dense<0.000000e+00> : vector<8x64xf32>
    %252 = tpu.matmul %249, %251, %cst_114 {dimension_numbers = #tpu.dot_dimension_numbers<[1], [0], [0], [1], [0, 0, 1, 1], [], []>} : vector<8x32xf32>, vector<32x64xf32>, vector<8x64xf32> -> vector<8x64xf32>
    %c1_115 = arith.constant 1 : index
    %c0_116 = arith.constant 0 : index
    %c0_117 = arith.constant 0 : index
    %253 = vector.load %arg12[%c1_115, %c0_116, %c0_117] : memref<2x1x64xf32, #tpu.memory_space<vmem>>, vector<1x1x64xf32>
    %254 = vector.shape_cast %253 : vector<1x1x64xf32> to vector<1x64xf32>
    %255 = vector.broadcast %254 : vector<1x64xf32> to vector<8x64xf32>
    %256 = arith.addf %252, %255 : vector<8x64xf32>
    %cst_118 = arith.constant 5.000000e-01 : f32
    %257 = vector.broadcast %cst_118 : f32 to vector<8x64xf32>
    %258 = arith.mulf %257, %256 : vector<8x64xf32>
    %cst_119 = arith.constant 4.471500e-02 : f32
    %259 = vector.broadcast %cst_119 : f32 to vector<8x64xf32>
    %260 = arith.mulf %259, %256 : vector<8x64xf32>
    %261 = arith.mulf %260, %256 : vector<8x64xf32>
    %262 = arith.mulf %261, %256 : vector<8x64xf32>
    %263 = arith.addf %256, %262 : vector<8x64xf32>
    %cst_120 = arith.constant 0.797884583 : f32
    %264 = vector.broadcast %cst_120 : f32 to vector<8x64xf32>
    %265 = arith.mulf %264, %263 : vector<8x64xf32>
    %266 = math.tanh %265 : vector<8x64xf32>
    %cst_121 = arith.constant 1.000000e+00 : f32
    %267 = vector.broadcast %cst_121 : f32 to vector<8x64xf32>
    %268 = arith.addf %267, %266 : vector<8x64xf32>
    %269 = arith.mulf %258, %268 : vector<8x64xf32>
    %c1_122 = arith.constant 1 : index
    %c0_123 = arith.constant 0 : index
    %c0_124 = arith.constant 0 : index
    %270 = vector.load %arg13[%c1_122, %c0_123, %c0_124] : memref<2x64x32xf32, #tpu.memory_space<vmem>>, vector<1x64x32xf32>
    %271 = vector.shape_cast %270 : vector<1x64x32xf32> to vector<64x32xf32>
    %cst_125 = arith.constant dense<0.000000e+00> : vector<8x32xf32>
    %272 = tpu.matmul %269, %271, %cst_125 {dimension_numbers = #tpu.dot_dimension_numbers<[1], [0], [0], [1], [0, 0, 1, 1], [], []>} : vector<8x64xf32>, vector<64x32xf32>, vector<8x32xf32> -> vector<8x32xf32>
    %c1_126 = arith.constant 1 : index
    %c0_127 = arith.constant 0 : index
    %c0_128 = arith.constant 0 : index
    %273 = vector.load %arg14[%c1_126, %c0_127, %c0_128] : memref<2x1x32xf32, #tpu.memory_space<vmem>>, vector<1x1x32xf32>
    %274 = vector.shape_cast %273 : vector<1x1x32xf32> to vector<1x32xf32>
    %275 = vector.broadcast %274 : vector<1x32xf32> to vector<8x32xf32>
    %276 = arith.addf %272, %275 : vector<8x32xf32>
    %277 = arith.addf %276, %249 : vector<8x32xf32>
    %c1_129 = arith.constant 1 : index
    %c0_130 = arith.constant 0 : index
    %c0_131 = arith.constant 0 : index
    %278 = vector.load %arg15[%c1_129, %c0_130, %c0_131] : memref<2x1x32xf32, #tpu.memory_space<vmem>>, vector<1x1x32xf32>
    %279 = vector.shape_cast %278 : vector<1x1x32xf32> to vector<1x32xf32>
    %c1_132 = arith.constant 1 : index
    %c0_133 = arith.constant 0 : index
    %c0_134 = arith.constant 0 : index
    %280 = vector.load %arg16[%c1_132, %c0_133, %c0_134] : memref<2x1x32xf32, #tpu.memory_space<vmem>>, vector<1x1x32xf32>
    %281 = vector.shape_cast %280 : vector<1x1x32xf32> to vector<1x32xf32>
    %cst_135 = arith.constant dense<0.000000e+00> : vector<8xf32>
    %282 = vector.multi_reduction <add>, %277, %cst_135 [1] : vector<8x32xf32> to vector<8xf32>
    %283 = vector.shape_cast %282 : vector<8xf32> to vector<8x1xf32>
    %cst_136 = arith.constant 3.200000e+01 : f32
    %284 = vector.broadcast %cst_136 : f32 to vector<8x1xf32>
    %285 = arith.divf %283, %284 : vector<8x1xf32>
    %286 = vector.broadcast %285 : vector<8x1xf32> to vector<8x32xf32>
    %287 = arith.subf %277, %286 : vector<8x32xf32>
    %288 = vector.broadcast %285 : vector<8x1xf32> to vector<8x32xf32>
    %289 = arith.subf %277, %288 : vector<8x32xf32>
    %290 = arith.mulf %287, %289 : vector<8x32xf32>
    %cst_137 = arith.constant dense<0.000000e+00> : vector<8xf32>
    %291 = vector.multi_reduction <add>, %290, %cst_137 [1] : vector<8x32xf32> to vector<8xf32>
    %292 = vector.shape_cast %291 : vector<8xf32> to vector<8x1xf32>
    %cst_138 = arith.constant 3.200000e+01 : f32
    %293 = vector.broadcast %cst_138 : f32 to vector<8x1xf32>
    %294 = arith.divf %292, %293 : vector<8x1xf32>
    %295 = vector.broadcast %285 : vector<8x1xf32> to vector<8x32xf32>
    %296 = arith.subf %277, %295 : vector<8x32xf32>
    %cst_139 = arith.constant 9.99999996E-13 : f32
    %297 = vector.broadcast %cst_139 : f32 to vector<8x1xf32>
    %298 = arith.addf %294, %297 : vector<8x1xf32>
    %299 = math.rsqrt %298 : vector<8x1xf32>
    %300 = vector.broadcast %299 : vector<8x1xf32> to vector<8x32xf32>
    %301 = arith.mulf %296, %300 : vector<8x32xf32>
    %302 = vector.broadcast %279 : vector<1x32xf32> to vector<8x32xf32>
    %303 = arith.mulf %301, %302 : vector<8x32xf32>
    %304 = vector.broadcast %281 : vector<1x32xf32> to vector<8x32xf32>
    %305 = arith.addf %303, %304 : vector<8x32xf32>
    %c0_140 = arith.constant 0 : index
    %c0_141 = arith.constant 0 : index
    %306 = vector.load %arg17[%c0_140, %c0_141] : memref<32x32xf32, #tpu.memory_space<vmem>>, vector<32x32xf32>
    %cst_142 = arith.constant dense<0.000000e+00> : vector<8x32xf32>
    %307 = tpu.matmul %305, %306, %cst_142 {dimension_numbers = #tpu.dot_dimension_numbers<[1], [0], [0], [1], [0, 0, 1, 1], [], []>} : vector<8x32xf32>, vector<32x32xf32>, vector<8x32xf32> -> vector<8x32xf32>
    %c0_143 = arith.constant 0 : index
    %c0_144 = arith.constant 0 : index
    %308 = vector.load %arg18[%c0_143, %c0_144] : memref<1x32xf32, #tpu.memory_space<vmem>>, vector<1x32xf32>
    %309 = vector.broadcast %308 : vector<1x32xf32> to vector<8x32xf32>
    %310 = arith.addf %307, %309 : vector<8x32xf32>
    %311 = math.tanh %310 : vector<8x32xf32>
    %c0_145 = arith.constant 0 : index
    %c0_146 = arith.constant 0 : index
    %312 = vector.load %arg19[%c0_145, %c0_146] : memref<32x2xf32, #tpu.memory_space<vmem>>, vector<32x2xf32>
    %cst_147 = arith.constant dense<0.000000e+00> : vector<8x2xf32>
    %313 = tpu.matmul %311, %312, %cst_147 {dimension_numbers = #tpu.dot_dimension_numbers<[1], [0], [0], [1], [0, 0, 1, 1], [], []>} : vector<8x32xf32>, vector<32x2xf32>, vector<8x2xf32> -> vector<8x2xf32>
    %c0_148 = arith.constant 0 : index
    %c0_149 = arith.constant 0 : index
    %314 = vector.load %arg20[%c0_148, %c0_149] : memref<1x2xf32, #tpu.memory_space<vmem>>, vector<1x2xf32>
    %315 = vector.broadcast %314 : vector<1x2xf32> to vector<8x2xf32>
    %316 = arith.addf %313, %315 : vector<8x2xf32>
    %317 = vector.extract_strided_slice %316 {offsets = [0, 0], sizes = [1, 2], strides = [1, 1]} : vector<8x2xf32> to vector<1x2xf32>
    %c0_150 = arith.constant 0 : index
    %c0_151 = arith.constant 0 : index
    %c0_152 = arith.constant 0 : index
    %318 = vector.load %arg21[%c0_150, %c0_151, %c0_152] : memref<1x1x2xf32, #tpu.memory_space<vmem>>, vector<1x1x2xf32>
    %319 = vector.shape_cast %318 : vector<1x1x2xf32> to vector<1x2xf32>
    %320 = vector.shape_cast %317 : vector<1x2xf32> to vector<1x1x2xf32>
    tpu.vector_store %arg21[%c0_150, %c0_151, %c0_152], %320 {strides = array<i32>} : memref<1x1x2xf32, #tpu.memory_space<vmem>>, vector<1x1x2xf32>,
    return
  }
  func.func @transform_0(%arg0: i32) -> (i32, i32, i32) {
    %c0_i32 = arith.constant 0 : i32
    %c0_i32_0 = arith.constant 0 : i32
    %c0_i32_1 = arith.constant 0 : i32
    return %arg0, %c0_i32, %c0_i32_0 : i32, i32, i32
  }
  func.func @transform_1(%arg0: i32) -> (i32, i32, i32) {
    %c0_i32 = arith.constant 0 : i32
    %c0_i32_0 = arith.constant 0 : i32
    %c0_i32_1 = arith.constant 0 : i32
    return %arg0, %c0_i32, %c0_i32_0 : i32, i32, i32
  }
  func.func @transform_2(%arg0: i32) -> (i32, i32) {
    %c0_i32 = arith.constant 0 : i32
    %c0_i32_0 = arith.constant 0 : i32
    %c0_i32_1 = arith.constant 0 : i32
    return %c0_i32, %c0_i32_0 : i32, i32
  }
  func.func @transform_3(%arg0: i32) -> (i32, i32) {
    %c0_i32 = arith.constant 0 : i32
    %c0_i32_0 = arith.constant 0 : i32
    %c0_i32_1 = arith.constant 0 : i32
    return %c0_i32, %c0_i32_0 : i32, i32
  }
  func.func @transform_4(%arg0: i32) -> (i32, i32, i32) {
    %c0_i32 = arith.constant 0 : i32
    %c0_i32_0 = arith.constant 0 : i32
    %c0_i32_1 = arith.constant 0 : i32
    %c0_i32_2 = arith.constant 0 : i32
    return %c0_i32, %c0_i32_0, %c0_i32_1 : i32, i32, i32
  }
  func.func @transform_5(%arg0: i32) -> (i32, i32, i32) {
    %c0_i32 = arith.constant 0 : i32
    %c0_i32_0 = arith.constant 0 : i32
    %c0_i32_1 = arith.constant 0 : i32
    %c0_i32_2 = arith.constant 0 : i32
    return %c0_i32, %c0_i32_0, %c0_i32_1 : i32, i32, i32
  }
  func.func @transform_6(%arg0: i32) -> (i32, i32, i32) {
    %c0_i32 = arith.constant 0 : i32
    %c0_i32_0 = arith.constant 0 : i32
    %c0_i32_1 = arith.constant 0 : i32
    %c0_i32_2 = arith.constant 0 : i32
    return %c0_i32, %c0_i32_0, %c0_i32_1 : i32, i32, i32
  }
  func.func @transform_7(%arg0: i32) -> (i32, i32, i32) {
    %c0_i32 = arith.constant 0 : i32
    %c0_i32_0 = arith.constant 0 : i32
    %c0_i32_1 = arith.constant 0 : i32
    %c0_i32_2 = arith.constant 0 : i32
    return %c0_i32, %c0_i32_0, %c0_i32_1 : i32, i32, i32
  }
  func.func @transform_8(%arg0: i32) -> (i32, i32, i32) {
    %c0_i32 = arith.constant 0 : i32
    %c0_i32_0 = arith.constant 0 : i32
    %c0_i32_1 = arith.constant 0 : i32
    %c0_i32_2 = arith.constant 0 : i32
    return %c0_i32, %c0_i32_0, %c0_i32_1 : i32, i32, i32
  }
  func.func @transform_9(%arg0: i32) -> (i32, i32, i32) {
    %c0_i32 = arith.constant 0 : i32
    %c0_i32_0 = arith.constant 0 : i32
    %c0_i32_1 = arith.constant 0 : i32
    %c0_i32_2 = arith.constant 0 : i32
    return %c0_i32, %c0_i32_0, %c0_i32_1 : i32, i32, i32
  }
  func.func @transform_10(%arg0: i32) -> (i32, i32, i32) {
    %c0_i32 = arith.constant 0 : i32
    %c0_i32_0 = arith.constant 0 : i32
    %c0_i32_1 = arith.constant 0 : i32
    %c0_i32_2 = arith.constant 0 : i32
    return %c0_i32, %c0_i32_0, %c0_i32_1 : i32, i32, i32
  }
  func.func @transform_11(%arg0: i32) -> (i32, i32, i32) {
    %c0_i32 = arith.constant 0 : i32
    %c0_i32_0 = arith.constant 0 : i32
    %c0_i32_1 = arith.constant 0 : i32
    %c0_i32_2 = arith.constant 0 : i32
    return %c0_i32, %c0_i32_0, %c0_i32_1 : i32, i32, i32
  }
  func.func @transform_12(%arg0: i32) -> (i32, i32, i32) {
    %c0_i32 = arith.constant 0 : i32
    %c0_i32_0 = arith.constant 0 : i32
    %c0_i32_1 = arith.constant 0 : i32
    %c0_i32_2 = arith.constant 0 : i32
    return %c0_i32, %c0_i32_0, %c0_i32_1 : i32, i32, i32
  }
  func.func @transform_13(%arg0: i32) -> (i32, i32, i32) {
    %c0_i32 = arith.constant 0 : i32
    %c0_i32_0 = arith.constant 0 : i32
    %c0_i32_1 = arith.constant 0 : i32
    %c0_i32_2 = arith.constant 0 : i32
    return %c0_i32, %c0_i32_0, %c0_i32_1 : i32, i32, i32
  }
  func.func @transform_14(%arg0: i32) -> (i32, i32, i32) {
    %c0_i32 = arith.constant 0 : i32
    %c0_i32_0 = arith.constant 0 : i32
    %c0_i32_1 = arith.constant 0 : i32
    %c0_i32_2 = arith.constant 0 : i32
    return %c0_i32, %c0_i32_0, %c0_i32_1 : i32, i32, i32
  }
  func.func @transform_15(%arg0: i32) -> (i32, i32, i32) {
    %c0_i32 = arith.constant 0 : i32
    %c0_i32_0 = arith.constant 0 : i32
    %c0_i32_1 = arith.constant 0 : i32
    %c0_i32_2 = arith.constant 0 : i32
    return %c0_i32, %c0_i32_0, %c0_i32_1 : i32, i32, i32
  }
  func.func @transform_16(%arg0: i32) -> (i32, i32) {
    %c0_i32 = arith.constant 0 : i32
    %c0_i32_0 = arith.constant 0 : i32
    %c0_i32_1 = arith.constant 0 : i32
    return %c0_i32, %c0_i32_0 : i32, i32
  }
  func.func @transform_17(%arg0: i32) -> (i32, i32) {
    %c0_i32 = arith.constant 0 : i32
    %c0_i32_0 = arith.constant 0 : i32
    %c0_i32_1 = arith.constant 0 : i32
    return %c0_i32, %c0_i32_0 : i32, i32
  }
  func.func @transform_18(%arg0: i32) -> (i32, i32) {
    %c0_i32 = arith.constant 0 : i32
    %c0_i32_0 = arith.constant 0 : i32
    %c0_i32_1 = arith.constant 0 : i32
    return %c0_i32, %c0_i32_0 : i32, i32
  }
  func.func @transform_19(%arg0: i32) -> (i32, i32) {
    %c0_i32 = arith.constant 0 : i32
    %c0_i32_0 = arith.constant 0 : i32
    %c0_i32_1 = arith.constant 0 : i32
    return %c0_i32, %c0_i32_0 : i32, i32
  }
  func.func @transform_20(%arg0: i32) -> (i32, i32, i32) {
    %c0_i32 = arith.constant 0 : i32
    %c0_i32_0 = arith.constant 0 : i32
    %c0_i32_1 = arith.constant 0 : i32
    return %arg0, %c0_i32, %c0_i32_0 : i32, i32, i32
  }
}

</mosaic_0001>

<llo_original>
// kernel: bert_pair_forward.1
$region0: #{bert_pair_forward.1}
  #allocation0 [shape = 'u32[]', space=smem, size = 0x4, offset = 0x4, fixed_abs, tag = 'smem constant byte address 0x4 - core index']
  #allocation1 [shape = 'u32[72,128]{1,0:T(1,128)}', space=vmem, size = 0x9000, scoped, tag = 'internal scratch']
  %s0 = inlined_call_operand.vmem [shape: f32[2,8,32], index: 0, kind: input, shape index: {}]
  %s1 = inlined_call_operand.vmem [shape: f32[2,1,8], index: 1, kind: input, shape index: {}]
  %s2 = inlined_call_operand.vmem [shape: f32[1,32], index: 2, kind: input, shape index: {}]
  %s3 = inlined_call_operand.vmem [shape: f32[1,32], index: 3, kind: input, shape index: {}]
  %s4 = inlined_call_operand.vmem [shape: f32[2,32,96], index: 4, kind: input, shape index: {}]
  %s5 = inlined_call_operand.vmem [shape: f32[2,1,96], index: 5, kind: input, shape index: {}]
  %s6 = inlined_call_operand.vmem [shape: f32[2,32,32], index: 6, kind: input, shape index: {}]
  %s7 = inlined_call_operand.vmem [shape: f32[2,1,32], index: 7, kind: input, shape index: {}]
  %s8 = inlined_call_operand.vmem [shape: f32[2,1,32], index: 8, kind: input, shape index: {}]
  %s9 = inlined_call_operand.vmem [shape: f32[2,1,32], index: 9, kind: input, shape index: {}]
  %s10 = inlined_call_operand.vmem [shape: f32[2,32,64], index: 10, kind: input, shape index: {}]
  %s11 = inlined_call_operand.vmem [shape: f32[2,1,64], index: 11, kind: input, shape index: {}]
  %s12 = inlined_call_operand.vmem [shape: f32[2,64,32], index: 12, kind: input, shape index: {}]
  %s13 = inlined_call_operand.vmem [shape: f32[2,1,32], index: 13, kind: input, shape index: {}]
  %s14 = inlined_call_operand.vmem [shape: f32[2,1,32], index: 14, kind: input, shape index: {}]
  %s15 = inlined_call_operand.vmem [shape: f32[2,1,32], index: 15, kind: input, shape index: {}]
  %s16 = inlined_call_operand.vmem [shape: f32[32,32], index: 16, kind: input, shape index: {}]
  %s17 = inlined_call_operand.vmem [shape: f32[1,32], index: 17, kind: input, shape index: {}]
  %s18 = inlined_call_operand.vmem [shape: f32[32,2], index: 18, kind: input, shape index: {}]
  %s19 = inlined_call_operand.vmem [shape: f32[1,2], index: 19, kind: input, shape index: {}]
  %s20 = inlined_call_operand.hbm [shape: f32[2,1,2], index: 20, kind: output, shape index: {}]
  %s21 = sld [smem:[#allocation0]]
  $region113: #{bert_pair_forward.1} parent=0
    _
  %s23 = ssub.s32 1, %s21
  %s24 = scalar_select 0, %s23, %s21
  $region1: #{bert_pair_forward.1} parent=0
    #allocation2 [shape = 'u8[1024]{0}', space=vmem, size = 0x400, scoped, tag = 'output window, operand 0']
    #allocation3 [shape = 's32[2]{0}', space=sflag, size = 0x8, scoped, tag = 'scoped memory for bert_pair_forward.1']
    %25 = vsyncpa [#allocation3], 0
    %s26 = scalar_lea.sflag [#allocation3], 1
    %27 = vsyncpa %s26, 0
    loop: start=0, step=1, limit=4
    $region2: #{bert_pair_forward.1} parent=1 // loop_pre_header
      _
    $region3: #{bert_pair_forward.1} parent=1 // loop_header
      %s29 = sphi 0, %s33
      %p30 = scmp.ge.s32.totalorder %s29, 4
      %s39 = sphi 0, %s41
      %s42 = sphi 0, %s39
      %s43 = sphi 0, %s42
      %s59 = sphi 0, %s43
      %s65 = sphi 0, %s67
      %s68 = sphi 0, %s65
      %s69 = sphi 0, %s68
      %s85 = sphi 0, %s69
      %s89 = sphi 0, %s89
      %s91 = sphi 0, %s89
      %s92 = sphi 0, %s91
      %s106 = sphi 0, %s92
      %s110 = sphi 0, %s110
      %s112 = sphi 0, %s110
      %s113 = sphi 0, %s112
      %s127 = sphi 0, %s113
      %s131 = sphi 0, %s131
      %s133 = sphi 0, %s131
      %s134 = sphi 0, %s133
      %s148 = sphi 0, %s134
      %s152 = sphi 0, %s152
      %s154 = sphi 0, %s152
      %s155 = sphi 0, %s154
      %s169 = sphi 0, %s155
      %s173 = sphi 0, %s173
      %s175 = sphi 0, %s173
      %s176 = sphi 0, %s175
      %s190 = sphi 0, %s176
      %s194 = sphi 0, %s194
      %s196 = sphi 0, %s194
      %s197 = sphi 0, %s196
      %s211 = sphi 0, %s197
      %s215 = sphi 0, %s215
      %s217 = sphi 0, %s215
      %s218 = sphi 0, %s217
      %s232 = sphi 0, %s218
      %s236 = sphi 0, %s236
      %s238 = sphi 0, %s236
      %s239 = sphi 0, %s238
      %s253 = sphi 0, %s239
      %s257 = sphi 0, %s257
      %s259 = sphi 0, %s257
      %s260 = sphi 0, %s259
      %s274 = sphi 0, %s260
      %s278 = sphi 0, %s278
      %s280 = sphi 0, %s278
      %s281 = sphi 0, %s280
      %s295 = sphi 0, %s281
      %s299 = sphi 0, %s299
      %s301 = sphi 0, %s299
      %s302 = sphi 0, %s301
      %s316 = sphi 0, %s302
      %s320 = sphi 0, %s320
      %s322 = sphi 0, %s320
      %s323 = sphi 0, %s322
      %s337 = sphi 0, %s323
      %s341 = sphi 0, %s341
      %s343 = sphi 0, %s341
      %s344 = sphi 0, %s343
      %s358 = sphi 0, %s344
      %s362 = sphi 0, %s362
      %s364 = sphi 0, %s362
      %s365 = sphi 0, %s364
      %s379 = sphi 0, %s365
      %s383 = sphi 0, %s383
      %s385 = sphi 0, %s383
      %s386 = sphi 0, %s385
      %s400 = sphi 0, %s386
      %s404 = sphi 0, %s404
      %s406 = sphi 0, %s404
      %s407 = sphi 0, %s406
      %s421 = sphi 0, %s407
      %s425 = sphi 0, %s425
      %s427 = sphi 0, %s425
      %s428 = sphi 0, %s427
      %s442 = sphi 0, %s428
      %s446 = sphi 0, %s446
      %s448 = sphi 0, %s446
      %s449 = sphi 0, %s448
      %s463 = sphi 0, %s449
      %s469 = sphi 0, %s471
      %s472 = sphi 0, %s469
      %s473 = sphi 0, %s472
      %s489 = sphi 0, %s473
    $region4: #{bert_pair_forward.1} parent=1 // loop_header_branch
      %32 = sbr.rel (%p30) target = $region8
    $region5: #{bert_pair_forward.1} parent=1 // loop_body
      %s34 = ssub.s32 %s29, 1
      %s35 = ssub.s32 %s29, 2
      %s36 = sadd.s32 %s29, 1
      %s37 = ssub.s32 %s29, %s36
      %p38 = scmp.eq.s32.totalorder %s37, 0
      %s40 = sadd.s32 %s39, 1
      %s41 = scalar_select %p38, %s39, %s40
      %p44 = pneg %p38
      %p45 = scmp.eq.s32.totalorder %s29, 1
      %p46 = por %p44, %p45
      %p47 = scmp.ne.s32.totalorder %s39, %s42
      %p48 = scmp.eq.s32.totalorder %s29, 0
      %p49 = por %p47, %p48
      %p50 = scmp.ne.s32.totalorder %s39, %s42
      %p51 = scmp.eq.s32.totalorder %s34, 1
      %p52 = por %p50, %p51
      %p53 = scmp.ne.s32.totalorder %s42, %s43
      %p54 = scmp.eq.s32.totalorder %s34, 0
      %p55 = por %p53, %p54
      %p56 = scmp.ne.s32.totalorder %s42, %s43
      %p57 = scmp.eq.s32.totalorder %s35, 1
      %p58 = por %p56, %p57
      %p60 = scmp.ne.s32.totalorder %s43, %s59
      %p61 = scmp.eq.s32.totalorder %s35, 0
      %p62 = por %p60, %p61
      %s63 = ssub.s32 %s29, %s36
      %p64 = scmp.eq.s32.totalorder %s63, 0
      %s66 = sadd.s32 %s65, 1
      %s67 = scalar_select %p64, %s65, %s66
      %p70 = pneg %p64
      %p71 = scmp.eq.s32.totalorder %s29, 1
      %p72 = por %p70, %p71
      %p73 = scmp.ne.s32.totalorder %s65, %s68
      %p74 = scmp.eq.s32.totalorder %s29, 0
      %p75 = por %p73, %p74
      %p76 = scmp.ne.s32.totalorder %s65, %s68
      %p77 = scmp.eq.s32.totalorder %s34, 1
      %p78 = por %p76, %p77
      %p79 = scmp.ne.s32.totalorder %s68, %s69
      %p80 = scmp.eq.s32.totalorder %s34, 0
      %p81 = por %p79, %p80
      %p82 = scmp.ne.s32.totalorder %s68, %s69
      %p83 = scmp.eq.s32.totalorder %s35, 1
      %p84 = por %p82, %p83
      %p86 = scmp.ne.s32.totalorder %s69, %s85
      %p87 = scmp.eq.s32.totalorder %s35, 0
      %p88 = por %p86, %p87
      %s90 = sadd.s32 %s89, 1
      %p93 = scmp.eq.s32.totalorder %s29, 1
      %p94 = scmp.ne.s32.totalorder %s89, %s91
      %p95 = scmp.eq.s32.totalorder %s29, 0
      %p96 = por %p94, %p95
      %p97 = scmp.ne.s32.totalorder %s89, %s91
      %p98 = scmp.eq.s32.totalorder %s34, 1
      %p99 = por %p97, %p98
      %p100 = scmp.ne.s32.totalorder %s91, %s92
      %p101 = scmp.eq.s32.totalorder %s34, 0
      %p102 = por %p100, %p101
      %p103 = scmp.ne.s32.totalorder %s91, %s92
      %p104 = scmp.eq.s32.totalorder %s35, 1
      %p105 = por %p103, %p104
      %p107 = scmp.ne.s32.totalorder %s92, %s106
      %p108 = scmp.eq.s32.totalorder %s35, 0
      %p109 = por %p107, %p108
      %s111 = sadd.s32 %s110, 1
      %p114 = scmp.eq.s32.totalorder %s29, 1
      %p115 = scmp.ne.s32.totalorder %s110, %s112
      %p116 = scmp.eq.s32.totalorder %s29, 0
      %p117 = por %p115, %p116
      %p118 = scmp.ne.s32.totalorder %s110, %s112
      %p119 = scmp.eq.s32.totalorder %s34, 1
      %p120 = por %p118, %p119
      %p121 = scmp.ne.s32.totalorder %s112, %s113
      %p122 = scmp.eq.s32.totalorder %s34, 0
      %p123 = por %p121, %p122
      %p124 = scmp.ne.s32.totalorder %s112, %s113
      %p125 = scmp.eq.s32.totalorder %s35, 1
      %p126 = por %p124, %p125
      %p128 = scmp.ne.s32.totalorder %s113, %s127
      %p129 = scmp.eq.s32.totalorder %s35, 0
      %p130 = por %p128, %p129
      %s132 = sadd.s32 %s131, 1
      %p135 = scmp.eq.s32.totalorder %s29, 1
      %p136 = scmp.ne.s32.totalorder %s131, %s133
      %p137 = scmp.eq.s32.totalorder %s29, 0
      %p138 = por %p136, %p137
      %p139 = scmp.ne.s32.totalorder %s131, %s133
      %p140 = scmp.eq.s32.totalorder %s34, 1
      %p141 = por %p139, %p140
      %p142 = scmp.ne.s32.totalorder %s133, %s134
      %p143 = scmp.eq.s32.totalorder %s34, 0
      %p144 = por %p142, %p143
      %p145 = scmp.ne.s32.totalorder %s133, %s134
      %p146 = scmp.eq.s32.totalorder %s35, 1
      %p147 = por %p145, %p146
      %p149 = scmp.ne.s32.totalorder %s134, %s148
      %p150 = scmp.eq.s32.totalorder %s35, 0
      %p151 = por %p149, %p150
      %s153 = sadd.s32 %s152, 1
      %p156 = scmp.eq.s32.totalorder %s29, 1
      %p157 = scmp.ne.s32.totalorder %s152, %s154
      %p158 = scmp.eq.s32.totalorder %s29, 0
      %p159 = por %p157, %p158
      %p160 = scmp.ne.s32.totalorder %s152, %s154
      %p161 = scmp.eq.s32.totalorder %s34, 1
      %p162 = por %p160, %p161
      %p163 = scmp.ne.s32.totalorder %s154, %s155
      %p164 = scmp.eq.s32.totalorder %s34, 0
      %p165 = por %p163, %p164
      %p166 = scmp.ne.s32.totalorder %s154, %s155
      %p167 = scmp.eq.s32.totalorder %s35, 1
      %p168 = por %p166, %p167
      %p170 = scmp.ne.s32.totalorder %s155, %s169
      %p171 = scmp.eq.s32.totalorder %s35, 0
      %p172 = por %p170, %p171
      %s174 = sadd.s32 %s173, 1
      %p177 = scmp.eq.s32.totalorder %s29, 1
      %p178 = scmp.ne.s32.totalorder %s173, %s175
      %p179 = scmp.eq.s32.totalorder %s29, 0
      %p180 = por %p178, %p179
      %p181 = scmp.ne.s32.totalorder %s173, %s175
      %p182 = scmp.eq.s32.totalorder %s34, 1
      %p183 = por %p181, %p182
      %p184 = scmp.ne.s32.totalorder %s175, %s176
      %p185 = scmp.eq.s32.totalorder %s34, 0
      %p186 = por %p184, %p185
      %p187 = scmp.ne.s32.totalorder %s175, %s176
      %p188 = scmp.eq.s32.totalorder %s35, 1
      %p189 = por %p187, %p188
      %p191 = scmp.ne.s32.totalorder %s176, %s190
      %p192 = scmp.eq.s32.totalorder %s35, 0
      %p193 = por %p191, %p192
      %s195 = sadd.s32 %s194, 1
      %p198 = scmp.eq.s32.totalorder %s29, 1
      %p199 = scmp.ne.s32.totalorder %s194, %s196
      %p200 = scmp.eq.s32.totalorder %s29, 0
      %p201 = por %p199, %p200
      %p202 = scmp.ne.s32.totalorder %s194, %s196
      %p203 = scmp.eq.s32.totalorder %s34, 1
      %p204 = por %p202, %p203
      %p205 = scmp.ne.s32.totalorder %s196, %s197
      %p206 = scmp.eq.s32.totalorder %s34, 0
      %p207 = por %p205, %p206
      %p208 = scmp.ne.s32.totalorder %s196, %s197
      %p209 = scmp.eq.s32.totalorder %s35, 1
      %p210 = por %p208, %p209
      %p212 = scmp.ne.s32.totalorder %s197, %s211
      %p213 = scmp.eq.s32.totalorder %s35, 0
      %p214 = por %p212, %p213
      %s216 = sadd.s32 %s215, 1
      %p219 = scmp.eq.s32.totalorder %s29, 1
      %p220 = scmp.ne.s32.totalorder %s215, %s217
      %p221 = scmp.eq.s32.totalorder %s29, 0
      %p222 = por %p220, %p221
      %p223 = scmp.ne.s32.totalorder %s215, %s217
      %p224 = scmp.eq.s32.totalorder %s34, 1
      %p225 = por %p223, %p224
      %p226 = scmp.ne.s32.totalorder %s217, %s218
      %p227 = scmp.eq.s32.totalorder %s34, 0
      %p228 = por %p226, %p227
      %p229 = scmp.ne.s32.totalorder %s217, %s218
      %p230 = scmp.eq.s32.totalorder %s35, 1
      %p231 = por %p229, %p230
      %p233 = scmp.ne.s32.totalorder %s218, %s232
      %p234 = scmp.eq.s32.totalorder %s35, 0
      %p235 = por %p233, %p234
      %s237 = sadd.s32 %s236, 1
      %p240 = scmp.eq.s32.totalorder %s29, 1
      %p241 = scmp.ne.s32.totalorder %s236, %s238
      %p242 = scmp.eq.s32.totalorder %s29, 0
      %p243 = por %p241, %p242
      %p244 = scmp.ne.s32.totalorder %s236, %s238
      %p245 = scmp.eq.s32.totalorder %s34, 1
      %p246 = por %p244, %p245
      %p247 = scmp.ne.s32.totalorder %s238, %s239
      %p248 = scmp.eq.s32.totalorder %s34, 0
      %p249 = por %p247, %p248
      %p250 = scmp.ne.s32.totalorder %s238, %s239
      %p251 = scmp.eq.s32.totalorder %s35, 1
      %p252 = por %p250, %p251
      %p254 = scmp.ne.s32.totalorder %s239, %s253
      %p255 = scmp.eq.s32.totalorder %s35, 0
      %p256 = por %p254, %p255
      %s258 = sadd.s32 %s257, 1
      %p261 = scmp.eq.s32.totalorder %s29, 1
      %p262 = scmp.ne.s32.totalorder %s257, %s259
      %p263 = scmp.eq.s32.totalorder %s29, 0
      %p264 = por %p262, %p263
      %p265 = scmp.ne.s32.totalorder %s257, %s259
      %p266 = scmp.eq.s32.totalorder %s34, 1
      %p267 = por %p265, %p266
      %p268 = scmp.ne.s32.totalorder %s259, %s260
      %p269 = scmp.eq.s32.totalorder %s34, 0
      %p270 = por %p268, %p269
      %p271 = scmp.ne.s32.totalorder %s259, %s260
      %p272 = scmp.eq.s32.totalorder %s35, 1
      %p273 = por %p271, %p272
      %p275 = scmp.ne.s32.totalorder %s260, %s274
      %p276 = scmp.eq.s32.totalorder %s35, 0
      %p277 = por %p275, %p276
      %s279 = sadd.s32 %s278, 1
      %p282 = scmp.eq.s32.totalorder %s29, 1
      %p283 = scmp.ne.s32.totalorder %s278, %s280
      %p284 = scmp.eq.s32.totalorder %s29, 0
      %p285 = por %p283, %p284
      %p286 = scmp.ne.s32.totalorder %s278, %s280
      %p287 = scmp.eq.s32.totalorder %s34, 1
      %p288 = por %p286, %p287
      %p289 = scmp.ne.s32.totalorder %s280, %s281
      %p290 = scmp.eq.s32.totalorder %s34, 0
      %p291 = por %p289, %p290
      %p292 = scmp.ne.s32.totalorder %s280, %s281
      %p293 = scmp.eq.s32.totalorder %s35, 1
      %p294 = por %p292, %p293
      %p296 = scmp.ne.s32.totalorder %s281, %s295
      %p297 = scmp.eq.s32.totalorder %s35, 0
      %p298 = por %p296, %p297
      %s300 = sadd.s32 %s299, 1
      %p303 = scmp.eq.s32.totalorder %s29, 1
      %p304 = scmp.ne.s32.totalorder %s299, %s301
      %p305 = scmp.eq.s32.totalorder %s29, 0
      %p306 = por %p304, %p305
      %p307 = scmp.ne.s32.totalorder %s299, %s301
      %p308 = scmp.eq.s32.totalorder %s34, 1
      %p309 = por %p307, %p308
      %p310 = scmp.ne.s32.totalorder %s301, %s302
      %p311 = scmp.eq.s32.totalorder %s34, 0
      %p312 = por %p310, %p311
      %p313 = scmp.ne.s32.totalorder %s301, %s302
      %p314 = scmp.eq.s32.totalorder %s35, 1
      %p315 = por %p313, %p314
      %p317 = scmp.ne.s32.totalorder %s302, %s316
      %p318 = scmp.eq.s32.totalorder %s35, 0
      %p319 = por %p317, %p318
      %s321 = sadd.s32 %s320, 1
      %p324 = scmp.eq.s32.totalorder %s29, 1
      %p325 = scmp.ne.s32.totalorder %s320, %s322
      %p326 = scmp.eq.s32.totalorder %s29, 0
      %p327 = por %p325, %p326
      %p328 = scmp.ne.s32.totalorder %s320, %s322
      %p329 = scmp.eq.s32.totalorder %s34, 1
      %p330 = por %p328, %p329
      %p331 = scmp.ne.s32.totalorder %s322, %s323
      %p332 = scmp.eq.s32.totalorder %s34, 0
      %p333 = por %p331, %p332
      %p334 = scmp.ne.s32.totalorder %s322, %s323
      %p335 = scmp.eq.s32.totalorder %s35, 1
      %p336 = por %p334, %p335
      %p338 = scmp.ne.s32.totalorder %s323, %s337
      %p339 = scmp.eq.s32.totalorder %s35, 0
      %p340 = por %p338, %p339
      %s342 = sadd.s32 %s341, 1
      %p345 = scmp.eq.s32.totalorder %s29, 1
      %p346 = scmp.ne.s32.totalorder %s341, %s343
      %p347 = scmp.eq.s32.totalorder %s29, 0
      %p348 = por %p346, %p347
      %p349 = scmp.ne.s32.totalorder %s341, %s343
      %p350 = scmp.eq.s32.totalorder %s34, 1
      %p351 = por %p349, %p350
      %p352 = scmp.ne.s32.totalorder %s343, %s344
      %p353 = scmp.eq.s32.totalorder %s34, 0
      %p354 = por %p352, %p353
      %p355 = scmp.ne.s32.totalorder %s343, %s344
      %p356 = scmp.eq.s32.totalorder %s35, 1
      %p357 = por %p355, %p356
      %p359 = scmp.ne.s32.totalorder %s344, %s358
      %p360 = scmp.eq.s32.totalorder %s35, 0
      %p361 = por %p359, %p360
      %s363 = sadd.s32 %s362, 1
      %p366 = scmp.eq.s32.totalorder %s29, 1
      %p367 = scmp.ne.s32.totalorder %s362, %s364
      %p368 = scmp.eq.s32.totalorder %s29, 0
      %p369 = por %p367, %p368
      %p370 = scmp.ne.s32.totalorder %s362, %s364
      %p371 = scmp.eq.s32.totalorder %s34, 1
      %p372 = por %p370, %p371
      %p373 = scmp.ne.s32.totalorder %s364, %s365
      %p374 = scmp.eq.s32.totalorder %s34, 0
      %p375 = por %p373, %p374
      %p376 = scmp.ne.s32.totalorder %s364, %s365
      %p377 = scmp.eq.s32.totalorder %s35, 1
      %p378 = por %p376, %p377
      %p380 = scmp.ne.s32.totalorder %s365, %s379
      %p381 = scmp.eq.s32.totalorder %s35, 0
      %p382 = por %p380, %p381
      %s384 = sadd.s32 %s383, 1
      %p387 = scmp.eq.s32.totalorder %s29, 1
      %p388 = scmp.ne.s32.totalorder %s383, %s385
      %p389 = scmp.eq.s32.totalorder %s29, 0
      %p390 = por %p388, %p389
      %p391 = scmp.ne.s32.totalorder %s383, %s385
      %p392 = scmp.eq.s32.totalorder %s34, 1
      %p393 = por %p391, %p392
      %p394 = scmp.ne.s32.totalorder %s385, %s386
      %p395 = scmp.eq.s32.totalorder %s34, 0
      %p396 = por %p394, %p395
      %p397 = scmp.ne.s32.totalorder %s385, %s386
      %p398 = scmp.eq.s32.totalorder %s35, 1
      %p399 = por %p397, %p398
      %p401 = scmp.ne.s32.totalorder %s386, %s400
      %p402 = scmp.eq.s32.totalorder %s35, 0
      %p403 = por %p401, %p402
      %s405 = sadd.s32 %s404, 1
      %p408 = scmp.eq.s32.totalorder %s29, 1
      %p409 = scmp.ne.s32.totalorder %s404, %s406
      %p410 = scmp.eq.s32.totalorder %s29, 0
      %p411 = por %p409, %p410
      %p412 = scmp.ne.s32.totalorder %s404, %s406
      %p413 = scmp.eq.s32.totalorder %s34, 1
      %p414 = por %p412, %p413
      %p415 = scmp.ne.s32.totalorder %s406, %s407
      %p416 = scmp.eq.s32.totalorder %s34, 0
      %p417 = por %p415, %p416
      %p418 = scmp.ne.s32.totalorder %s406, %s407
      %p419 = scmp.eq.s32.totalorder %s35, 1
      %p420 = por %p418, %p419
      %p422 = scmp.ne.s32.totalorder %s407, %s421
      %p423 = scmp.eq.s32.totalorder %s35, 0
      %p424 = por %p422, %p423
      %s426 = sadd.s32 %s425, 1
      %p429 = scmp.eq.s32.totalorder %s29, 1
      %p430 = scmp.ne.s32.totalorder %s425, %s427
      %p431 = scmp.eq.s32.totalorder %s29, 0
      %p432 = por %p430, %p431
      %p433 = scmp.ne.s32.totalorder %s425, %s427
      %p434 = scmp.eq.s32.totalorder %s34, 1
      %p435 = por %p433, %p434
      %p436 = scmp.ne.s32.totalorder %s427, %s428
      %p437 = scmp.eq.s32.totalorder %s34, 0
      %p438 = por %p436, %p437
      %p439 = scmp.ne.s32.totalorder %s427, %s428
      %p440 = scmp.eq.s32.totalorder %s35, 1
      %p441 = por %p439, %p440
      %p443 = scmp.ne.s32.totalorder %s428, %s442
      %p444 = scmp.eq.s32.totalorder %s35, 0
      %p445 = por %p443, %p444
      %s447 = sadd.s32 %s446, 1
      %p450 = scmp.eq.s32.totalorder %s29, 1
      %p451 = scmp.ne.s32.totalorder %s446, %s448
      %p452 = scmp.eq.s32.totalorder %s29, 0
      %p453 = por %p451, %p452
      %p454 = scmp.ne.s32.totalorder %s446, %s448
      %p455 = scmp.eq.s32.totalorder %s34, 1
      %p456 = por %p454, %p455
      %p457 = scmp.ne.s32.totalorder %s448, %s449
      %p458 = scmp.eq.s32.totalorder %s34, 0
      %p459 = por %p457, %p458
      %p460 = scmp.ne.s32.totalorder %s448, %s449
      %p461 = scmp.eq.s32.totalorder %s35, 1
      %p462 = por %p460, %p461
      %p464 = scmp.ne.s32.totalorder %s449, %s463
      %p465 = scmp.eq.s32.totalorder %s35, 0
      %p466 = por %p464, %p465
      %s467 = ssub.s32 %s29, %s36
      %p468 = scmp.eq.s32.totalorder %s467, 0
      %s470 = sadd.s32 %s469, 1
      %s471 = scalar_select %p468, %s469, %s470
      %p474 = pneg %p468
      %p475 = scmp.eq.s32.totalorder %s29, 1
      %p476 = por %p474, %p475
      %p477 = scmp.ne.s32.totalorder %s469, %s472
      %p478 = scmp.eq.s32.totalorder %s29, 0
      %p479 = por %p477, %p478
      %p480 = scmp.ne.s32.totalorder %s469, %s472
      %p481 = scmp.eq.s32.totalorder %s34, 1
      %p482 = por %p480, %p481
      %p483 = scmp.ne.s32.totalorder %s472, %s473
      %p484 = scmp.eq.s32.totalorder %s34, 0
      %p485 = por %p483, %p484
      %p486 = scmp.ne.s32.totalorder %s472, %s473
      %p487 = scmp.eq.s32.totalorder %s35, 1
      %p488 = por %p486, %p487
      %p490 = scmp.ne.s32.totalorder %s473, %s489
      %p491 = scmp.eq.s32.totalorder %s35, 0
      %p492 = por %p490, %p491
      %p493 = scmp.le.s32.totalorder 1, %s29
      %p494 = scmp.lt.s32.totalorder %s29, 3
      %p495 = pnand %p493, %p494
      %p496 = pneg %p495
      // Predicated region
      $region9: #{bert_pair_forward.1} parent=5 // pred_check
        _
      $region10: #{bert_pair_forward.1} parent=5 // pred_check_branch
        %498 = sbr.rel (%p495) target = $region12
      $region11: #{bert_pair_forward.1} parent=5 // pred_region
        %s499 = ssub.s32 %s29, 1
        // Predicated region
        $region13: #{bert_pair_forward.1} parent=11 // pred_check
          %p500 = pneg %p102
        $region14: #{bert_pair_forward.1} parent=11 // pred_check_branch
          %502 = sbr.rel (%p500) target = $region16
        $region15: #{bert_pair_forward.1} parent=11 // pred_region
          _
        $region16: #{bert_pair_forward.1} parent=11 // pred_fallthru
          _
        // Predicated region
        $region17: #{bert_pair_forward.1} parent=11 // pred_check
          %p503 = pneg %p123
        $region18: #{bert_pair_forward.1} parent=11 // pred_check_branch
          %505 = sbr.rel (%p503) target = $region20
        $region19: #{bert_pair_forward.1} parent=11 // pred_region
          _
        $region20: #{bert_pair_forward.1} parent=11 // pred_fallthru
          _
        // Predicated region
        $region21: #{bert_pair_forward.1} parent=11 // pred_check
          %p506 = pneg %p144
        $region22: #{bert_pair_forward.1} parent=11 // pred_check_branch
          %508 = sbr.rel (%p506) target = $region24
        $region23: #{bert_pair_forward.1} parent=11 // pred_region
          _
        $region24: #{bert_pair_forward.1} parent=11 // pred_fallthru
          _
        // Predicated region
        $region25: #{bert_pair_forward.1} parent=11 // pred_check
          %p509 = pneg %p165
        $region26: #{bert_pair_forward.1} parent=11 // pred_check_branch
          %511 = sbr.rel (%p509) target = $region28
        $region27: #{bert_pair_forward.1} parent=11 // pred_region
          _
        $region28: #{bert_pair_forward.1} parent=11 // pred_fallthru
          _
        // Predicated region
        $region29: #{bert_pair_forward.1} parent=11 // pred_check
          %p512 = pneg %p186
        $region30: #{bert_pair_forward.1} parent=11 // pred_check_branch
          %514 = sbr.rel (%p512) target = $region32
        $region31: #{bert_pair_forward.1} parent=11 // pred_region
          _
        $region32: #{bert_pair_forward.1} parent=11 // pred_fallthru
          _
        // Predicated region
        $region33: #{bert_pair_forward.1} parent=11 // pred_check
          %p515 = pneg %p207
        $region34: #{bert_pair_forward.1} parent=11 // pred_check_branch
          %517 = sbr.rel (%p515) target = $region36
        $region35: #{bert_pair_forward.1} parent=11 // pred_region
          _
        $region36: #{bert_pair_forward.1} parent=11 // pred_fallthru
          _
        // Predicated region
        $region37: #{bert_pair_forward.1} parent=11 // pred_check
          %p518 = pneg %p228
        $region38: #{bert_pair_forward.1} parent=11 // pred_check_branch
          %520 = sbr.rel (%p518) target = $region40
        $region39: #{bert_pair_forward.1} parent=11 // pred_region
          _
        $region40: #{bert_pair_forward.1} parent=11 // pred_fallthru
          _
        // Predicated region
        $region41: #{bert_pair_forward.1} parent=11 // pred_check
          %p521 = pneg %p249
        $region42: #{bert_pair_forward.1} parent=11 // pred_check_branch
          %523 = sbr.rel (%p521) target = $region44
        $region43: #{bert_pair_forward.1} parent=11 // pred_region
          _
        $region44: #{bert_pair_forward.1} parent=11 // pred_fallthru
          _
        // Predicated region
        $region45: #{bert_pair_forward.1} parent=11 // pred_check
          %p524 = pneg %p270
        $region46: #{bert_pair_forward.1} parent=11 // pred_check_branch
          %526 = sbr.rel (%p524) target = $region48
        $region47: #{bert_pair_forward.1} parent=11 // pred_region
          _
        $region48: #{bert_pair_forward.1} parent=11 // pred_fallthru
          _
        // Predicated region
        $region49: #{bert_pair_forward.1} parent=11 // pred_check
          %p527 = pneg %p291
        $region50: #{bert_pair_forward.1} parent=11 // pred_check_branch
          %529 = sbr.rel (%p527) target = $region52
        $region51: #{bert_pair_forward.1} parent=11 // pred_region
          _
        $region52: #{bert_pair_forward.1} parent=11 // pred_fallthru
          _
        // Predicated region
        $region53: #{bert_pair_forward.1} parent=11 // pred_check
          %p530 = pneg %p312
        $region54: #{bert_pair_forward.1} parent=11 // pred_check_branch
          %532 = sbr.rel (%p530) target = $region56
        $region55: #{bert_pair_forward.1} parent=11 // pred_region
          _
        $region56: #{bert_pair_forward.1} parent=11 // pred_fallthru
          _
        // Predicated region
        $region57: #{bert_pair_forward.1} parent=11 // pred_check
          %p533 = pneg %p333
        $region58: #{bert_pair_forward.1} parent=11 // pred_check_branch
          %535 = sbr.rel (%p533) target = $region60
        $region59: #{bert_pair_forward.1} parent=11 // pred_region
          _
        $region60: #{bert_pair_forward.1} parent=11 // pred_fallthru
          _
        // Predicated region
        $region61: #{bert_pair_forward.1} parent=11 // pred_check
          %p536 = pneg %p354
        $region62: #{bert_pair_forward.1} parent=11 // pred_check_branch
          %538 = sbr.rel (%p536) target = $region64
        $region63: #{bert_pair_forward.1} parent=11 // pred_region
          _
        $region64: #{bert_pair_forward.1} parent=11 // pred_fallthru
          _
        // Predicated region
        $region65: #{bert_pair_forward.1} parent=11 // pred_check
          %p539 = pneg %p375
        $region66: #{bert_pair_forward.1} parent=11 // pred_check_branch
          %541 = sbr.rel (%p539) target = $region68
        $region67: #{bert_pair_forward.1} parent=11 // pred_region
          _
        $region68: #{bert_pair_forward.1} parent=11 // pred_fallthru
          _
        // Predicated region
        $region69: #{bert_pair_forward.1} parent=11 // pred_check
          %p542 = pneg %p396
        $region70: #{bert_pair_forward.1} parent=11 // pred_check_branch
          %544 = sbr.rel (%p542) target = $region72
        $region71: #{bert_pair_forward.1} parent=11 // pred_region
          _
        $region72: #{bert_pair_forward.1} parent=11 // pred_fallthru
          _
        // Predicated region
        $region73: #{bert_pair_forward.1} parent=11 // pred_check
          %p545 = pneg %p417
        $region74: #{bert_pair_forward.1} parent=11 // pred_check_branch
          %547 = sbr.rel (%p545) target = $region76
        $region75: #{bert_pair_forward.1} parent=11 // pred_region
          _
        $region76: #{bert_pair_forward.1} parent=11 // pred_fallthru
          _
        // Predicated region
        $region77: #{bert_pair_forward.1} parent=11 // pred_check
          %p548 = pneg %p438
        $region78: #{bert_pair_forward.1} parent=11 // pred_check_branch
          %550 = sbr.rel (%p548) target = $region80
        $region79: #{bert_pair_forward.1} parent=11 // pred_region
          _
        $region80: #{bert_pair_forward.1} parent=11 // pred_fallthru
          _
        // Predicated region
        $region81: #{bert_pair_forward.1} parent=11 // pred_check
          %p551 = pneg %p459
        $region82: #{bert_pair_forward.1} parent=11 // pred_check_branch
          %553 = sbr.rel (%p551) target = $region84
        $region83: #{bert_pair_forward.1} parent=11 // pred_region
          _
        $region84: #{bert_pair_forward.1} parent=11 // pred_fallthru
          _
      $region12: #{bert_pair_forward.1} parent=5 // pred_fallthru
        _
      %p554 = scmp.lt.s32.totalorder %s29, 2
      // Predicated region
      $region85: #{bert_pair_forward.1} parent=5 // pred_check
        %p555 = pneg %p554
      $region86: #{bert_pair_forward.1} parent=5 // pred_check_branch
        %557 = sbr.rel (%p555) target = $region88
      $region87: #{bert_pair_forward.1} parent=5 // pred_region
        // Predicated region
        $region89: #{bert_pair_forward.1} parent=87 // pred_check
          %p558 = pneg %p49
        $region90: #{bert_pair_forward.1} parent=87 // pred_check_branch
          %560 = sbr.rel (%p558) target = $region92
        $region91: #{bert_pair_forward.1} parent=87 // pred_region
          %p561 = scmp.lt.s32.totalorder %s29, 1
          %s562 = scalar_select %p561, %s29, 1
          %s563 = smul.addr %s562, 8
          %s564 = scalar_lea.vmem %s0, %s563
        $region92: #{bert_pair_forward.1} parent=87 // pred_fallthru
          _
        // Predicated region
        $region93: #{bert_pair_forward.1} parent=87 // pred_check
          %p565 = pneg %p75
        $region94: #{bert_pair_forward.1} parent=87 // pred_check_branch
          %567 = sbr.rel (%p565) target = $region96
        $region95: #{bert_pair_forward.1} parent=87 // pred_region
          %p568 = scmp.lt.s32.totalorder %s29, 1
          %s569 = scalar_select %p568, %s29, 1
          %s570 = scalar_lea.vmem %s1, %s569
        $region96: #{bert_pair_forward.1} parent=87 // pred_fallthru
          _
      $region88: #{bert_pair_forward.1} parent=5 // pred_fallthru
        _
      %p571 = scmp.le.s32.totalorder 1, %s29
      %p572 = scmp.lt.s32.totalorder %s29, 3
      %p573 = pnand %p571, %p572
      %p574 = pneg %p573
      // Predicated region
      $region97: #{bert_pair_forward.1} parent=5 // pred_check
        _
      $region98: #{bert_pair_forward.1} parent=5 // pred_check_branch
        %576 = sbr.rel (%p573) target = $region100
      $region99: #{bert_pair_forward.1} parent=5 // pred_region
        %s577 = ssub.s32 %s29, 1
        %p578 = scmp.lt.s32.totalorder %s34, 1
        %s579 = scalar_select %p578, %s34, 1
        %s580 = smul.addr %s579, 8
        %s581 = scalar_lea.vmem %s0, %s580
        %p582 = pneg %p55
        %p583 = pneg %p52
        %p584 = scmp.lt.s32.totalorder %s34, 1
        %s585 = scalar_select %p584, %s34, 1
        %s586 = scalar_lea.vmem %s1, %s585
        %p587 = pneg %p81
        %p588 = pneg %p78
        %p589 = pneg %p102
        %p590 = pneg %p99
        %p591 = pneg %p123
        %p592 = pneg %p120
        %p593 = pneg %p144
        %p594 = pneg %p141
        %p595 = pneg %p165
        %p596 = pneg %p162
        %p597 = pneg %p186
        %p598 = pneg %p183
        %p599 = pneg %p207
        %p600 = pneg %p204
        %p601 = pneg %p228
        %p602 = pneg %p225
        %p603 = pneg %p249
        %p604 = pneg %p246
        %p605 = pneg %p270
        %p606 = pneg %p267
        %p607 = pneg %p291
        %p608 = pneg %p288
        %p609 = pneg %p312
        %p610 = pneg %p309
        %p611 = pneg %p333
        %p612 = pneg %p330
        %p613 = pneg %p354
        %p614 = pneg %p351
        %p615 = pneg %p375
        %p616 = pneg %p372
        %p617 = pneg %p396
        %p618 = pneg %p393
        %p619 = pneg %p417
        %p620 = pneg %p414
        %p621 = pneg %p438
        %p622 = pneg %p435
        %p623 = pneg %p459
        %p624 = pneg %p456
        %p625 = pneg %p485
        %p626 = pneg %p482
        %s627 = sand.u32 %s472, 1
        %s628 = scalar_lea.sflag [#allocation3], %s627
        %s629 = sand.u32 %s472, 1
        %s630 = scalar_lea.vmem [#allocation2], %s629
        %p631 = scmp.lt.s32.totalorder %s34, 1
        %s632 = scalar_select %p631, %s34, 1
        %s633 = smul.addr %s632, 8
        %s634 = scalar_lea.vmem %s0, %s633
        %p635 = scmp.lt.s32.totalorder %s34, 1
        %s636 = scalar_select %p635, %s34, 1
        %s637 = scalar_lea.vmem %s1, %s636
        %v638 = vld [vmem:[%s634] sm:$0xff]
        %v639 = vld [vmem:[%s2] sm:$0x1]
        %v640 = vld [vmem:[%s3] sm:$0x1]
        %vm641 = vcmask 261120
        %v642 = vsel %vm641, %v638, 0.0
        %643 = vadd.xlane.f32.xlu0 %v642
        %v644 = vpop.xlane.xlu0 %643
        %v645 = vrcp.pop 32.0
        %v646 = vmul.f32 32.0, %v645
        %v647 = vsub.f32 1.0, %v646
        %v648 = vmul.f32 %v645, %v647
        %v649 = vadd.f32 %v645, %v648
        %vm650 = vweird.f32 %v645
        %v651 = vsel %vm650, %v645, %v649
        %v652 = vmul.f32 %v644, %v651
        %v653 = vsub.f32 %v638, %v652
        %v654 = vmul.f32 %v653, %v653
        %v655 = vsel %vm641, %v654, 0.0
        %656 = vadd.xlane.f32.xlu0 %v655
        %v657 = vpop.xlane.xlu0 %656
        %v658 = vmul.f32 %v657, %v651
        %v659 = vadd.f32 %v658, 1e-12
        %v660 = vrsqrt.pop %v659
        %v661 = vmul.f32 %v660, %v659
        %v662 = vmul.f32 %v661, %v660
        %v663 = vmul.f32 0.5, %v662
        %v664 = vsub.f32 1.5, %v663
        %v665 = vmul.f32 %v660, %v664
        %vm666 = vweird.f32 %v659
        %vm667 = vweird.f32 %v660
        %vm668 = vmor %vm666, %vm667
        %v669 = vsel %vm668, %v660, %v665
        %v670 = vmul.f32 %v653, %v669
        %v672 = vperm.slane %v639, 0
        %v674 = vmul.f32 %v670, %v672
        %v676 = vperm.slane %v640, 0
        %v678 = vadd.f32 %v674, %v676
        %v679 = vld [vmem:[%s637] sm:$0x1]
        %v680 = vld [vmem:[%s4] sm:$0xff]
        %v681 = vld [vmem:[%s4 + $0x8] sm:$0xff]
        %v682 = vld [vmem:[%s4 + $0x10] sm:$0xff]
        %v683 = vld [vmem:[%s4 + $0x18] sm:$0xff]
        %v684 = vld [vmem:[%s5] sm:$0x1]
        %v686 = vperm.slane %v684, 0
        %v689 = vsel %vm641, %v678, 0
        %691 = vmatpush.msra.mxu0 0.0
        %692 = vmatpush.msra.mxu0 0.0
        %693 = vmatpush.msra.mxu0 0.0
        %694 = vmatpush.msra.mxu0 0.0
        %695 = vmatpush.msra.mxu0 0.0
        %696 = vmatpush.msra.mxu0 0.0
        %697 = vmatpush.msra.mxu0 0.0
        %698 = vmatpush.msra.mxu0 0.0
        %699 = vmatpush.msra.mxu0 0.0
        %700 = vmatpush.msra.mxu0 0.0
        %701 = vmatpush.msra.mxu0 0.0
        %702 = vmatpush.msra.mxu0 0.0
        %703 = vmatpush.msra.mxu0 %v683
        %704 = vmatpush.msra.mxu0 %v682
        %705 = vmatpush.msra.mxu0 %v681
        %706 = vmatpush.msra.mxu0 %v680
        %707 = vmatmul.f32.gmra.mxu0 %v689
        %v708 = vpop.f32.mrf.mxu0
        %v709 = vadd.f32 %v686, %v708
        %710 = vdwg.mxu0
        %712 = vrot.lane.b32.xlu0 %v709, 96
        %v713 = vpop.permute.xlu0 %712
        %vm714 = vcmask 130048
        %v715 = vsel %vm714, %v709, 0
        %v717 = vsel %vm714, %v713, 0
        %719 = vmatpush.xpose.msra.mxu0 0.0
        %720 = vmatpush.xpose.msra.mxu0 0.0
        %721 = vmatpush.xpose.msra.mxu0 0.0
        %722 = vmatpush.xpose.msra.mxu0 0.0
        %723 = vmatpush.xpose.msra.mxu0 0.0
        %724 = vmatpush.xpose.msra.mxu0 0.0
        %725 = vmatpush.xpose.msra.mxu0 0.0
        %726 = vmatpush.xpose.msra.mxu0 0.0
        %727 = vmatpush.xpose.msra.mxu0 0.0
        %728 = vmatpush.xpose.msra.mxu0 0.0
        %729 = vmatpush.xpose.msra.mxu0 0.0
        %730 = vmatpush.xpose.msra.mxu0 0.0
        %731 = vmatpush.xpose.msra.mxu0 0.0
        %732 = vmatpush.xpose.msra.mxu0 0.0
        %733 = vmatpush.xpose.msra.mxu0 0.0
        %734 = vmatpush.xpose.msra.mxu0 %v717
        %735 = vmatmul.f32.gmra.mxu0 %v715
        %v736 = vpop.f32.mrf.mxu0
        %v737 = vadd.f32 0.0, %v736
        %738 = vdwg.mxu0
        %v739 = vmul.f32 %v737, 0.25
        %v741 = vperm.slane %v679, 0
        %v743 = vadd.f32 %v739, %v741
        %vm744 = vcmask 64512
        %v745 = vsel %vm744, %v743, -inf
        %746 = vmax.xlane.f32.xlu0 %v745
        %v747 = vpop.xlane.xlu0 %746
        %v748 = vsub.f32 %v743, %v747
        %v749 = vmul.f32 %v748, 1.442695
        %v750 = vpow.pop %v749
        %v751 = vsel %vm744, %v750, 0.0
        %752 = vadd.xlane.f32.xlu0 %v751
        %v753 = vpop.xlane.xlu0 %752
        %v754 = vrcp.pop %v753
        %v755 = vmul.f32 %v750, %v754
        %756 = vrot.lane.b32.xlu0 %v709, 64
        %v757 = vpop.permute.xlu0 %756
        %v760 = vsel %vm744, %v755, 0
        %762 = vmatpush.msra.mxu0 0.0
        %763 = vmatpush.msra.mxu0 0.0
        %764 = vmatpush.msra.mxu0 0.0
        %765 = vmatpush.msra.mxu0 0.0
        %766 = vmatpush.msra.mxu0 0.0
        %767 = vmatpush.msra.mxu0 0.0
        %768 = vmatpush.msra.mxu0 0.0
        %769 = vmatpush.msra.mxu0 0.0
        %770 = vmatpush.msra.mxu0 0.0
        %771 = vmatpush.msra.mxu0 0.0
        %772 = vmatpush.msra.mxu0 0.0
        %773 = vmatpush.msra.mxu0 0.0
        %774 = vmatpush.msra.mxu0 0.0
        %775 = vmatpush.msra.mxu0 0.0
        %776 = vmatpush.msra.mxu0 0.0
        %777 = vmatpush.msra.mxu0 %v757
        %778 = vmatmul.f32.gmra.mxu0 %v760
        %v779 = vpop.f32.mrf.mxu0
        %v780 = vadd.f32 0.0, %v779
        %781 = vdwg.mxu0
        %782 = vrot.lane.b32.xlu0 %v709, 112
        %v783 = vpop.permute.xlu0 %782
        %784 = vrot.lane.b32.xlu0 %v709, 80
        %v785 = vpop.permute.xlu0 %784
        %v786 = vsel %vm714, %v783, 0
        %v788 = vsel %vm714, %v785, 0
        %790 = vmatpush.xpose.msra.mxu0 0.0
        %791 = vmatpush.xpose.msra.mxu0 0.0
        %792 = vmatpush.xpose.msra.mxu0 0.0
        %793 = vmatpush.xpose.msra.mxu0 0.0
        %794 = vmatpush.xpose.msra.mxu0 0.0
        %795 = vmatpush.xpose.msra.mxu0 0.0
        %796 = vmatpush.xpose.msra.mxu0 0.0
        %797 = vmatpush.xpose.msra.mxu0 0.0
        %798 = vmatpush.xpose.msra.mxu0 0.0
        %799 = vmatpush.xpose.msra.mxu0 0.0
        %800 = vmatpush.xpose.msra.mxu0 0.0
        %801 = vmatpush.xpose.msra.mxu0 0.0
        %802 = vmatpush.xpose.msra.mxu0 0.0
        %803 = vmatpush.xpose.msra.mxu0 0.0
        %804 = vmatpush.xpose.msra.mxu0 0.0
        %805 = vmatpush.xpose.msra.mxu0 %v788
        %806 = vmatmul.f32.gmra.mxu0 %v786
        %v807 = vpop.f32.mrf.mxu0
        %v808 = vadd.f32 0.0, %v807
        %809 = vdwg.mxu0
        %v810 = vmul.f32 %v808, 0.25
        %v811 = vadd.f32 %v810, %v741
        %v812 = vsel %vm744, %v811, -inf
        %813 = vmax.xlane.f32.xlu0 %v812
        %v814 = vpop.xlane.xlu0 %813
        %v815 = vsub.f32 %v811, %v814
        %v816 = vmul.f32 %v815, 1.442695
        %v817 = vpow.pop %v816
        %v818 = vsel %vm744, %v817, 0.0
        %819 = vadd.xlane.f32.xlu0 %v818
        %v820 = vpop.xlane.xlu0 %819
        %v821 = vrcp.pop %v820
        %v822 = vmul.f32 %v817, %v821
        %823 = vrot.lane.b32.xlu0 %v709, 48
        %v824 = vpop.permute.xlu0 %823
        %v827 = vsel %vm744, %v822, 0
        %829 = vmatpush.msra.mxu0 0.0
        %830 = vmatpush.msra.mxu0 0.0
        %831 = vmatpush.msra.mxu0 0.0
        %832 = vmatpush.msra.mxu0 0.0
        %833 = vmatpush.msra.mxu0 0.0
        %834 = vmatpush.msra.mxu0 0.0
        %835 = vmatpush.msra.mxu0 0.0
        %836 = vmatpush.msra.mxu0 0.0
        %837 = vmatpush.msra.mxu0 0.0
        %838 = vmatpush.msra.mxu0 0.0
        %839 = vmatpush.msra.mxu0 0.0
        %840 = vmatpush.msra.mxu0 0.0
        %841 = vmatpush.msra.mxu0 0.0
        %842 = vmatpush.msra.mxu0 0.0
        %843 = vmatpush.msra.mxu0 0.0
        %844 = vmatpush.msra.mxu0 %v824
        %845 = vmatmul.f32.gmra.mxu0 %v827
        %v846 = vpop.f32.mrf.mxu0
        %v847 = vadd.f32 0.0, %v846
        %848 = vdwg.mxu0
        %850 = vrot.lane.b32.xlu0 %v847, 16
        %v851 = vpop.permute.xlu0 %850
        %v853 = vsel %vm714, %v780, %v851
        %v854 = vld [vmem:[%s6] sm:$0xff]
        %v855 = vld [vmem:[%s6 + $0x8] sm:$0xff]
        %v856 = vld [vmem:[%s6 + $0x10] sm:$0xff]
        %v857 = vld [vmem:[%s6 + $0x18] sm:$0xff]
        %v858 = vld [vmem:[%s7] sm:$0x1]
        %v860 = vperm.slane %v858, 0
        %v863 = vsel %vm641, %v853, 0
        %865 = vmatpush.msra.mxu0 0.0
        %866 = vmatpush.msra.mxu0 0.0
        %867 = vmatpush.msra.mxu0 0.0
        %868 = vmatpush.msra.mxu0 0.0
        %869 = vmatpush.msra.mxu0 0.0
        %870 = vmatpush.msra.mxu0 0.0
        %871 = vmatpush.msra.mxu0 0.0
        %872 = vmatpush.msra.mxu0 0.0
        %873 = vmatpush.msra.mxu0 0.0
        %874 = vmatpush.msra.mxu0 0.0
        %875 = vmatpush.msra.mxu0 0.0
        %876 = vmatpush.msra.mxu0 0.0
        %877 = vmatpush.msra.mxu0 %v857
        %878 = vmatpush.msra.mxu0 %v856
        %879 = vmatpush.msra.mxu0 %v855
        %880 = vmatpush.msra.mxu0 %v854
        %881 = vmatmul.f32.gmra.mxu0 %v863
        %v882 = vpop.f32.mrf.mxu0
        %v883 = vadd.f32 %v860, %v882
        %884 = vdwg.mxu0
        %v885 = vadd.f32 %v883, %v678
        %v886 = vld [vmem:[%s8] sm:$0x1]
        %v887 = vld [vmem:[%s9] sm:$0x1]
        %v888 = vsel %vm641, %v885, 0.0
        %889 = vadd.xlane.f32.xlu0 %v888
        %v890 = vpop.xlane.xlu0 %889
        %v891 = vmul.f32 %v890, %v651
        %v892 = vsub.f32 %v885, %v891
        %v893 = vmul.f32 %v892, %v892
        %v894 = vsel %vm641, %v893, 0.0
        %895 = vadd.xlane.f32.xlu0 %v894
        %v896 = vpop.xlane.xlu0 %895
        %v897 = vmul.f32 %v896, %v651
        %v898 = vadd.f32 %v897, 1e-12
        %v899 = vrsqrt.pop %v898
        %v900 = vmul.f32 %v899, %v898
        %v901 = vmul.f32 %v900, %v899
        %v902 = vmul.f32 0.5, %v901
        %v903 = vsub.f32 1.5, %v902
        %v904 = vmul.f32 %v899, %v903
        %vm905 = vweird.f32 %v898
        %vm906 = vweird.f32 %v899
        %vm907 = vmor %vm905, %vm906
        %v908 = vsel %vm907, %v899, %v904
        %v909 = vmul.f32 %v892, %v908
        %v911 = vperm.slane %v886, 0
        %v913 = vmul.f32 %v909, %v911
        %v915 = vperm.slane %v887, 0
        %v917 = vadd.f32 %v913, %v915
        %v918 = vld [vmem:[%s10] sm:$0xff]
        %v919 = vld [vmem:[%s10 + $0x8] sm:$0xff]
        %v920 = vld [vmem:[%s10 + $0x10] sm:$0xff]
        %v921 = vld [vmem:[%s10 + $0x18] sm:$0xff]
        %v922 = vld [vmem:[%s11] sm:$0x1]
        %v924 = vperm.slane %v922, 0
        %v927 = vsel %vm641, %v917, 0
        %929 = vmatpush.msra.mxu0 0.0
        %930 = vmatpush.msra.mxu0 0.0
        %931 = vmatpush.msra.mxu0 0.0
        %932 = vmatpush.msra.mxu0 0.0
        %933 = vmatpush.msra.mxu0 0.0
        %934 = vmatpush.msra.mxu0 0.0
        %935 = vmatpush.msra.mxu0 0.0
        %936 = vmatpush.msra.mxu0 0.0
        %937 = vmatpush.msra.mxu0 0.0
        %938 = vmatpush.msra.mxu0 0.0
        %939 = vmatpush.msra.mxu0 0.0
        %940 = vmatpush.msra.mxu0 0.0
        %941 = vmatpush.msra.mxu0 %v921
        %942 = vmatpush.msra.mxu0 %v920
        %943 = vmatpush.msra.mxu0 %v919
        %944 = vmatpush.msra.mxu0 %v918
        %945 = vmatmul.f32.gmra.mxu0 %v927
        %v946 = vpop.f32.mrf.mxu0
        %v947 = vadd.f32 %v924, %v946
        %948 = vdwg.mxu0
        %v949 = vmul.f32 %v947, 0.5
        %v950 = vmul.f32 %v947, 0.044715
        %v951 = vmul.f32 %v950, %v947
        %v952 = vmul.f32 %v951, %v947
        %v953 = vadd.f32 %v947, %v952
        %v954 = vmul.f32 %v953, 0.7978846
        %v955 = vtanh.pop %v954
        %v956 = vadd.f32 %v955, 1.0
        %v957 = vmul.f32 %v949, %v956
        %v958 = vld [vmem:[%s12] sm:$0xff]
        %v959 = vld [vmem:[%s12 + $0x8] sm:$0xff]
        %v960 = vld [vmem:[%s12 + $0x10] sm:$0xff]
        %v961 = vld [vmem:[%s12 + $0x18] sm:$0xff]
        %v962 = vld [vmem:[%s12 + $0x20] sm:$0xff]
        %v963 = vld [vmem:[%s12 + $0x28] sm:$0xff]
        %v964 = vld [vmem:[%s12 + $0x30] sm:$0xff]
        %v965 = vld [vmem:[%s12 + $0x38] sm:$0xff]
        %v966 = vld [vmem:[%s13] sm:$0x1]
        %v968 = vperm.slane %v966, 0
        %vm970 = vcmask 523264
        %v972 = vsel %vm970, %v957, 0
        %974 = vmatpush.msra.mxu0 0.0
        %975 = vmatpush.msra.mxu0 0.0
        %976 = vmatpush.msra.mxu0 0.0
        %977 = vmatpush.msra.mxu0 0.0
        %978 = vmatpush.msra.mxu0 0.0
        %979 = vmatpush.msra.mxu0 0.0
        %980 = vmatpush.msra.mxu0 0.0
        %981 = vmatpush.msra.mxu0 0.0
        %982 = vmatpush.msra.mxu0 %v965
        %983 = vmatpush.msra.mxu0 %v964
        %984 = vmatpush.msra.mxu0 %v963
        %985 = vmatpush.msra.mxu0 %v962
        %986 = vmatpush.msra.mxu0 %v961
        %987 = vmatpush.msra.mxu0 %v960
        %988 = vmatpush.msra.mxu0 %v959
        %989 = vmatpush.msra.mxu0 %v958
        %990 = vmatmul.f32.gmra.mxu0 %v972
        %v991 = vpop.f32.mrf.mxu0
        %v992 = vadd.f32 %v968, %v991
        %993 = vdwg.mxu0
        %v994 = vadd.f32 %v992, %v917
        %v995 = vld [vmem:[%s14] sm:$0x1]
        %v996 = vld [vmem:[%s15] sm:$0x1]
        %v997 = vsel %vm641, %v994, 0.0
        %998 = vadd.xlane.f32.xlu0 %v997
        %v999 = vpop.xlane.xlu0 %998
        %v1000 = vmul.f32 %v999, %v651
        %v1001 = vsub.f32 %v994, %v1000
        %v1002 = vmul.f32 %v1001, %v1001
        %v1003 = vsel %vm641, %v1002, 0.0
        %1004 = vadd.xlane.f32.xlu0 %v1003
        %v1005 = vpop.xlane.xlu0 %1004
        %v1006 = vmul.f32 %v1005, %v651
        %v1007 = vadd.f32 %v1006, 1e-12
        %v1008 = vrsqrt.pop %v1007
        %v1009 = vmul.f32 %v1008, %v1007
        %v1010 = vmul.f32 %v1009, %v1008
        %v1011 = vmul.f32 0.5, %v1010
        %v1012 = vsub.f32 1.5, %v1011
        %v1013 = vmul.f32 %v1008, %v1012
        %vm1014 = vweird.f32 %v1007
        %vm1015 = vweird.f32 %v1008
        %vm1016 = vmor %vm1014, %vm1015
        %v1017 = vsel %vm1016, %v1008, %v1013
        %v1018 = vmul.f32 %v1001, %v1017
        %v1020 = vperm.slane %v995, 0
        %v1022 = vmul.f32 %v1018, %v1020
        %v1024 = vperm.slane %v996, 0
        %v1026 = vadd.f32 %v1022, %v1024
        %s1027 = scalar_lea.vmem %s4, 32
        %v1028 = vld [vmem:[%s1027] sm:$0xff]
        %v1029 = vld [vmem:[%s1027 + $0x8] sm:$0xff]
        %v1030 = vld [vmem:[%s1027 + $0x10] sm:$0xff]
        %v1031 = vld [vmem:[%s1027 + $0x18] sm:$0xff]
        %s1032 = scalar_lea.vmem %s5, 1
        %v1033 = vld [vmem:[%s1032] sm:$0x1]
        %v1035 = vperm.slane %v1033, 0
        %v1038 = vsel %vm641, %v1026, 0
        %1040 = vmatpush.msra.mxu0 0.0
        %1041 = vmatpush.msra.mxu0 0.0
        %1042 = vmatpush.msra.mxu0 0.0
        %1043 = vmatpush.msra.mxu0 0.0
        %1044 = vmatpush.msra.mxu0 0.0
        %1045 = vmatpush.msra.mxu0 0.0
        %1046 = vmatpush.msra.mxu0 0.0
        %1047 = vmatpush.msra.mxu0 0.0
        %1048 = vmatpush.msra.mxu0 0.0
        %1049 = vmatpush.msra.mxu0 0.0
        %1050 = vmatpush.msra.mxu0 0.0
        %1051 = vmatpush.msra.mxu0 0.0
        %1052 = vmatpush.msra.mxu0 %v1031
        %1053 = vmatpush.msra.mxu0 %v1030
        %1054 = vmatpush.msra.mxu0 %v1029
        %1055 = vmatpush.msra.mxu0 %v1028
        %1056 = vmatmul.f32.gmra.mxu0 %v1038
        %v1057 = vpop.f32.mrf.mxu0
        %v1058 = vadd.f32 %v1035, %v1057
        %1059 = vdwg.mxu0
        %1061 = vrot.lane.b32.xlu0 %v1058, 96
        %v1062 = vpop.permute.xlu0 %1061
        %v1063 = vsel %vm714, %v1058, 0
        %v1065 = vsel %vm714, %v1062, 0
        %1067 = vmatpush.xpose.msra.mxu0 0.0
        %1068 = vmatpush.xpose.msra.mxu0 0.0
        %1069 = vmatpush.xpose.msra.mxu0 0.0
        %1070 = vmatpush.xpose.msra.mxu0 0.0
        %1071 = vmatpush.xpose.msra.mxu0 0.0
        %1072 = vmatpush.xpose.msra.mxu0 0.0
        %1073 = vmatpush.xpose.msra.mxu0 0.0
        %1074 = vmatpush.xpose.msra.mxu0 0.0
        %1075 = vmatpush.xpose.msra.mxu0 0.0
        %1076 = vmatpush.xpose.msra.mxu0 0.0
        %1077 = vmatpush.xpose.msra.mxu0 0.0
        %1078 = vmatpush.xpose.msra.mxu0 0.0
        %1079 = vmatpush.xpose.msra.mxu0 0.0
        %1080 = vmatpush.xpose.msra.mxu0 0.0
        %1081 = vmatpush.xpose.msra.mxu0 0.0
        %1082 = vmatpush.xpose.msra.mxu0 %v1065
        %1083 = vmatmul.f32.gmra.mxu0 %v1063
        %v1084 = vpop.f32.mrf.mxu0
        %v1085 = vadd.f32 0.0, %v1084
        %1086 = vdwg.mxu0
        %v1087 = vmul.f32 %v1085, 0.25
        %v1088 = vadd.f32 %v1087, %v741
        %v1089 = vsel %vm744, %v1088, -inf
        %1090 = vmax.xlane.f32.xlu0 %v1089
        %v1091 = vpop.xlane.xlu0 %1090
        %v1092 = vsub.f32 %v1088, %v1091
        %v1093 = vmul.f32 %v1092, 1.442695
        %v1094 = vpow.pop %v1093
        %v1095 = vsel %vm744, %v1094, 0.0
        %1096 = vadd.xlane.f32.xlu0 %v1095
        %v1097 = vpop.xlane.xlu0 %1096
        %v1098 = vrcp.pop %v1097
        %v1099 = vmul.f32 %v1094, %v1098
        %1100 = vrot.lane.b32.xlu0 %v1058, 64
        %v1101 = vpop.permute.xlu0 %1100
        %v1104 = vsel %vm744, %v1099, 0
        %1106 = vmatpush.msra.mxu0 0.0
        %1107 = vmatpush.msra.mxu0 0.0
        %1108 = vmatpush.msra.mxu0 0.0
        %1109 = vmatpush.msra.mxu0 0.0
        %1110 = vmatpush.msra.mxu0 0.0
        %1111 = vmatpush.msra.mxu0 0.0
        %1112 = vmatpush.msra.mxu0 0.0
        %1113 = vmatpush.msra.mxu0 0.0
        %1114 = vmatpush.msra.mxu0 0.0
        %1115 = vmatpush.msra.mxu0 0.0
        %1116 = vmatpush.msra.mxu0 0.0
        %1117 = vmatpush.msra.mxu0 0.0
        %1118 = vmatpush.msra.mxu0 0.0
        %1119 = vmatpush.msra.mxu0 0.0
        %1120 = vmatpush.msra.mxu0 0.0
        %1121 = vmatpush.msra.mxu0 %v1101
        %1122 = vmatmul.f32.gmra.mxu0 %v1104
        %v1123 = vpop.f32.mrf.mxu0
        %v1124 = vadd.f32 0.0, %v1123
        %1125 = vdwg.mxu0
        %1126 = vrot.lane.b32.xlu0 %v1058, 112
        %v1127 = vpop.permute.xlu0 %1126
        %1128 = vrot.lane.b32.xlu0 %v1058, 80
        %v1129 = vpop.permute.xlu0 %1128
        %v1130 = vsel %vm714, %v1127, 0
        %v1132 = vsel %vm714, %v1129, 0
        %1134 = vmatpush.xpose.msra.mxu0 0.0
        %1135 = vmatpush.xpose.msra.mxu0 0.0
        %1136 = vmatpush.xpose.msra.mxu0 0.0
        %1137 = vmatpush.xpose.msra.mxu0 0.0
        %1138 = vmatpush.xpose.msra.mxu0 0.0
        %1139 = vmatpush.xpose.msra.mxu0 0.0
        %1140 = vmatpush.xpose.msra.mxu0 0.0
        %1141 = vmatpush.xpose.msra.mxu0 0.0
        %1142 = vmatpush.xpose.msra.mxu0 0.0
        %1143 = vmatpush.xpose.msra.mxu0 0.0
        %1144 = vmatpush.xpose.msra.mxu0 0.0
        %1145 = vmatpush.xpose.msra.mxu0 0.0
        %1146 = vmatpush.xpose.msra.mxu0 0.0
        %1147 = vmatpush.xpose.msra.mxu0 0.0
        %1148 = vmatpush.xpose.msra.mxu0 0.0
        %1149 = vmatpush.xpose.msra.mxu0 %v1132
        %1150 = vmatmul.f32.gmra.mxu0 %v1130
        %v1151 = vpop.f32.mrf.mxu0
        %v1152 = vadd.f32 0.0, %v1151
        %1153 = vdwg.mxu0
        %v1154 = vmul.f32 %v1152, 0.25
        %v1155 = vadd.f32 %v1154, %v741
        %v1156 = vsel %vm744, %v1155, -inf
        %1157 = vmax.xlane.f32.xlu0 %v1156
        %v1158 = vpop.xlane.xlu0 %1157
        %v1159 = vsub.f32 %v1155, %v1158
        %v1160 = vmul.f32 %v1159, 1.442695
        %v1161 = vpow.pop %v1160
        %v1162 = vsel %vm744, %v1161, 0.0
        %1163 = vadd.xlane.f32.xlu0 %v1162
        %v1164 = vpop.xlane.xlu0 %1163
        %v1165 = vrcp.pop %v1164
        %v1166 = vmul.f32 %v1161, %v1165
        %1167 = vrot.lane.b32.xlu0 %v1058, 48
        %v1168 = vpop.permute.xlu0 %1167
        %v1171 = vsel %vm744, %v1166, 0
        %1173 = vmatpush.msra.mxu0 0.0
        %1174 = vmatpush.msra.mxu0 0.0
        %1175 = vmatpush.msra.mxu0 0.0
        %1176 = vmatpush.msra.mxu0 0.0
        %1177 = vmatpush.msra.mxu0 0.0
        %1178 = vmatpush.msra.mxu0 0.0
        %1179 = vmatpush.msra.mxu0 0.0
        %1180 = vmatpush.msra.mxu0 0.0
        %1181 = vmatpush.msra.mxu0 0.0
        %1182 = vmatpush.msra.mxu0 0.0
        %1183 = vmatpush.msra.mxu0 0.0
        %1184 = vmatpush.msra.mxu0 0.0
        %1185 = vmatpush.msra.mxu0 0.0
        %1186 = vmatpush.msra.mxu0 0.0
        %1187 = vmatpush.msra.mxu0 0.0
        %1188 = vmatpush.msra.mxu0 %v1168
        %1189 = vmatmul.f32.gmra.mxu0 %v1171
        %v1190 = vpop.f32.mrf.mxu0
        %v1191 = vadd.f32 0.0, %v1190
        %1192 = vdwg.mxu0
        %1194 = vrot.lane.b32.xlu0 %v1191, 16
        %v1195 = vpop.permute.xlu0 %1194
        %v1197 = vsel %vm714, %v1124, %v1195
        %s1198 = scalar_lea.vmem %s6, 32
        %v1199 = vld [vmem:[%s1198] sm:$0xff]
        %v1200 = vld [vmem:[%s1198 + $0x8] sm:$0xff]
        %v1201 = vld [vmem:[%s1198 + $0x10] sm:$0xff]
        %v1202 = vld [vmem:[%s1198 + $0x18] sm:$0xff]
        %s1203 = scalar_lea.vmem %s7, 1
        %v1204 = vld [vmem:[%s1203] sm:$0x1]
        %v1206 = vperm.slane %v1204, 0
        %v1209 = vsel %vm641, %v1197, 0
        %1211 = vmatpush.msra.mxu0 0.0
        %1212 = vmatpush.msra.mxu0 0.0
        %1213 = vmatpush.msra.mxu0 0.0
        %1214 = vmatpush.msra.mxu0 0.0
        %1215 = vmatpush.msra.mxu0 0.0
        %1216 = vmatpush.msra.mxu0 0.0
        %1217 = vmatpush.msra.mxu0 0.0
        %1218 = vmatpush.msra.mxu0 0.0
        %1219 = vmatpush.msra.mxu0 0.0
        %1220 = vmatpush.msra.mxu0 0.0
        %1221 = vmatpush.msra.mxu0 0.0
        %1222 = vmatpush.msra.mxu0 0.0
        %1223 = vmatpush.msra.mxu0 %v1202
        %1224 = vmatpush.msra.mxu0 %v1201
        %1225 = vmatpush.msra.mxu0 %v1200
        %1226 = vmatpush.msra.mxu0 %v1199
        %1227 = vmatmul.f32.gmra.mxu0 %v1209
        %v1228 = vpop.f32.mrf.mxu0
        %v1229 = vadd.f32 %v1206, %v1228
        %1230 = vdwg.mxu0
        %v1231 = vadd.f32 %v1229, %v1026
        %s1232 = scalar_lea.vmem %s8, 1
        %v1233 = vld [vmem:[%s1232] sm:$0x1]
        %s1234 = scalar_lea.vmem %s9, 1
        %v1235 = vld [vmem:[%s1234] sm:$0x1]
        %v1236 = vsel %vm641, %v1231, 0.0
        %1237 = vadd.xlane.f32.xlu0 %v1236
        %v1238 = vpop.xlane.xlu0 %1237
        %v1239 = vmul.f32 %v1238, %v651
        %v1240 = vsub.f32 %v1231, %v1239
        %v1241 = vmul.f32 %v1240, %v1240
        %v1242 = vsel %vm641, %v1241, 0.0
        %1243 = vadd.xlane.f32.xlu0 %v1242
        %v1244 = vpop.xlane.xlu0 %1243
        %v1245 = vmul.f32 %v1244, %v651
        %v1246 = vadd.f32 %v1245, 1e-12
        %v1247 = vrsqrt.pop %v1246
        %v1248 = vmul.f32 %v1247, %v1246
        %v1249 = vmul.f32 %v1248, %v1247
        %v1250 = vmul.f32 0.5, %v1249
        %v1251 = vsub.f32 1.5, %v1250
        %v1252 = vmul.f32 %v1247, %v1251
        %vm1253 = vweird.f32 %v1246
        %vm1254 = vweird.f32 %v1247
        %vm1255 = vmor %vm1253, %vm1254
        %v1256 = vsel %vm1255, %v1247, %v1252
        %v1257 = vmul.f32 %v1240, %v1256
        %v1259 = vperm.slane %v1233, 0
        %v1261 = vmul.f32 %v1257, %v1259
        %v1263 = vperm.slane %v1235, 0
        %v1265 = vadd.f32 %v1261, %v1263
        %s1266 = scalar_lea.vmem %s10, 32
        %v1267 = vld [vmem:[%s1266] sm:$0xff]
        %v1268 = vld [vmem:[%s1266 + $0x8] sm:$0xff]
        %v1269 = vld [vmem:[%s1266 + $0x10] sm:$0xff]
        %v1270 = vld [vmem:[%s1266 + $0x18] sm:$0xff]
        %s1271 = scalar_lea.vmem %s11, 1
        %v1272 = vld [vmem:[%s1271] sm:$0x1]
        %v1274 = vperm.slane %v1272, 0
        %v1277 = vsel %vm641, %v1265, 0
        %1279 = vmatpush.msra.mxu0 0.0
        %1280 = vmatpush.msra.mxu0 0.0
        %1281 = vmatpush.msra.mxu0 0.0
        %1282 = vmatpush.msra.mxu0 0.0
        %1283 = vmatpush.msra.mxu0 0.0
        %1284 = vmatpush.msra.mxu0 0.0
        %1285 = vmatpush.msra.mxu0 0.0
        %1286 = vmatpush.msra.mxu0 0.0
        %1287 = vmatpush.msra.mxu0 0.0
        %1288 = vmatpush.msra.mxu0 0.0
        %1289 = vmatpush.msra.mxu0 0.0
        %1290 = vmatpush.msra.mxu0 0.0
        %1291 = vmatpush.msra.mxu0 %v1270
        %1292 = vmatpush.msra.mxu0 %v1269
        %1293 = vmatpush.msra.mxu0 %v1268
        %1294 = vmatpush.msra.mxu0 %v1267
        %1295 = vmatmul.f32.gmra.mxu0 %v1277
        %v1296 = vpop.f32.mrf.mxu0
        %v1297 = vadd.f32 %v1274, %v1296
        %1298 = vdwg.mxu0
        %v1299 = vmul.f32 %v1297, 0.5
        %v1300 = vmul.f32 %v1297, 0.044715
        %v1301 = vmul.f32 %v1300, %v1297
        %v1302 = vmul.f32 %v1301, %v1297
        %v1303 = vadd.f32 %v1297, %v1302
        %v1304 = vmul.f32 %v1303, 0.7978846
        %v1305 = vtanh.pop %v1304
        %v1306 = vadd.f32 %v1305, 1.0
        %v1307 = vmul.f32 %v1299, %v1306
        %s1308 = scalar_lea.vmem %s12, 64
        %v1309 = vld [vmem:[%s1308] sm:$0xff]
        %v1310 = vld [vmem:[%s1308 + $0x8] sm:$0xff]
        %v1311 = vld [vmem:[%s1308 + $0x10] sm:$0xff]
        %v1312 = vld [vmem:[%s1308 + $0x18] sm:$0xff]
        %v1313 = vld [vmem:[%s1308 + $0x20] sm:$0xff]
        %v1314 = vld [vmem:[%s1308 + $0x28] sm:$0xff]
        %v1315 = vld [vmem:[%s1308 + $0x30] sm:$0xff]
        %v1316 = vld [vmem:[%s1308 + $0x38] sm:$0xff]
        %s1317 = scalar_lea.vmem %s13, 1
        %v1318 = vld [vmem:[%s1317] sm:$0x1]
        %v1320 = vperm.slane %v1318, 0
        %v1323 = vsel %vm970, %v1307, 0
        %1325 = vmatpush.msra.mxu0 0.0
        %1326 = vmatpush.msra.mxu0 0.0
        %1327 = vmatpush.msra.mxu0 0.0
        %1328 = vmatpush.msra.mxu0 0.0
        %1329 = vmatpush.msra.mxu0 0.0
        %1330 = vmatpush.msra.mxu0 0.0
        %1331 = vmatpush.msra.mxu0 0.0
        %1332 = vmatpush.msra.mxu0 0.0
        %1333 = vmatpush.msra.mxu0 %v1316
        %1334 = vmatpush.msra.mxu0 %v1315
        %1335 = vmatpush.msra.mxu0 %v1314
        %1336 = vmatpush.msra.mxu0 %v1313
        %1337 = vmatpush.msra.mxu0 %v1312
        %1338 = vmatpush.msra.mxu0 %v1311
        %1339 = vmatpush.msra.mxu0 %v1310
        %1340 = vmatpush.msra.mxu0 %v1309
        %1341 = vmatmul.f32.gmra.mxu0 %v1323
        %v1342 = vpop.f32.mrf.mxu0
        %v1343 = vadd.f32 %v1320, %v1342
        %1344 = vdwg.mxu0
        %v1345 = vadd.f32 %v1343, %v1265
        %s1346 = scalar_lea.vmem %s14, 1
        %v1347 = vld [vmem:[%s1346] sm:$0x1]
        %s1348 = scalar_lea.vmem %s15, 1
        %v1349 = vld [vmem:[%s1348] sm:$0x1]
        %v1350 = vsel %vm641, %v1345, 0.0
        %1351 = vadd.xlane.f32.xlu0 %v1350
        %v1352 = vpop.xlane.xlu0 %1351
        %v1353 = vmul.f32 %v1352, %v651
        %v1354 = vsub.f32 %v1345, %v1353
        %v1355 = vmul.f32 %v1354, %v1354
        %v1356 = vsel %vm641, %v1355, 0.0
        %1357 = vadd.xlane.f32.xlu0 %v1356
        %v1358 = vpop.xlane.xlu0 %1357
        %v1359 = vmul.f32 %v1358, %v651
        %v1360 = vadd.f32 %v1359, 1e-12
        %v1361 = vrsqrt.pop %v1360
        %v1362 = vmul.f32 %v1361, %v1360
        %v1363 = vmul.f32 %v1362, %v1361
        %v1364 = vmul.f32 0.5, %v1363
        %v1365 = vsub.f32 1.5, %v1364
        %v1366 = vmul.f32 %v1361, %v1365
        %vm1367 = vweird.f32 %v1360
        %vm1368 = vweird.f32 %v1361
        %vm1369 = vmor %vm1367, %vm1368
        %v1370 = vsel %vm1369, %v1361, %v1366
        %v1371 = vmul.f32 %v1354, %v1370
        %v1373 = vperm.slane %v1347, 0
        %v1375 = vmul.f32 %v1371, %v1373
        %v1377 = vperm.slane %v1349, 0
        %v1379 = vadd.f32 %v1375, %v1377
        %v1380 = vld [vmem:[%s16] sm:$0xff]
        %v1381 = vld [vmem:[%s16 + $0x8] sm:$0xff]
        %v1382 = vld [vmem:[%s16 + $0x10] sm:$0xff]
        %v1383 = vld [vmem:[%s16 + $0x18] sm:$0xff]
        %v1384 = vld [vmem:[%s17] sm:$0x1]
        %v1386 = vperm.slane %v1384, 0
        %v1389 = vsel %vm641, %v1379, 0
        %1391 = vmatpush.msra.mxu0 0.0
        %1392 = vmatpush.msra.mxu0 0.0
        %1393 = vmatpush.msra.mxu0 0.0
        %1394 = vmatpush.msra.mxu0 0.0
        %1395 = vmatpush.msra.mxu0 0.0
        %1396 = vmatpush.msra.mxu0 0.0
        %1397 = vmatpush.msra.mxu0 0.0
        %1398 = vmatpush.msra.mxu0 0.0
        %1399 = vmatpush.msra.mxu0 0.0
        %1400 = vmatpush.msra.mxu0 0.0
        %1401 = vmatpush.msra.mxu0 0.0
        %1402 = vmatpush.msra.mxu0 0.0
        %1403 = vmatpush.msra.mxu0 %v1383
        %1404 = vmatpush.msra.mxu0 %v1382
        %1405 = vmatpush.msra.mxu0 %v1381
        %1406 = vmatpush.msra.mxu0 %v1380
        %1407 = vmatmul.f32.gmra.mxu0 %v1389
        %v1408 = vpop.f32.mrf.mxu0
        %v1409 = vadd.f32 %v1386, %v1408
        %1410 = vdwg.mxu0
        %v1411 = vtanh.pop %v1409
        %v1412 = vld [vmem:[%s18] sm:$0xff]
        %v1413 = vld [vmem:[%s18 + $0x8] sm:$0xff]
        %v1414 = vld [vmem:[%s18 + $0x10] sm:$0xff]
        %v1415 = vld [vmem:[%s18 + $0x18] sm:$0xff]
        %v1416 = vld [vmem:[%s19] sm:$0x1]
        %v1418 = vperm.slane %v1416, 0
        %v1421 = vsel %vm641, %v1411, 0
        %1423 = vmatpush.msra.mxu0 0.0
        %1424 = vmatpush.msra.mxu0 0.0
        %1425 = vmatpush.msra.mxu0 0.0
        %1426 = vmatpush.msra.mxu0 0.0
        %1427 = vmatpush.msra.mxu0 0.0
        %1428 = vmatpush.msra.mxu0 0.0
        %1429 = vmatpush.msra.mxu0 0.0
        %1430 = vmatpush.msra.mxu0 0.0
        %1431 = vmatpush.msra.mxu0 0.0
        %1432 = vmatpush.msra.mxu0 0.0
        %1433 = vmatpush.msra.mxu0 0.0
        %1434 = vmatpush.msra.mxu0 0.0
        %1435 = vmatpush.msra.mxu0 %v1415
        %1436 = vmatpush.msra.mxu0 %v1414
        %1437 = vmatpush.msra.mxu0 %v1413
        %1438 = vmatpush.msra.mxu0 %v1412
        %1439 = vmatmul.f32.gmra.mxu0 %v1421
        %v1440 = vpop.f32.mrf.mxu0
        %v1441 = vadd.f32 %v1418, %v1440
        %1442 = vdwg.mxu0
        %vm1443 = vcmask 8192
        %1444 = vst.msk [vmem:[%s630] sm:$0x1] %vm1443, %v1441
        %s1445 = sand.u32 %s472, 1
        %s1446 = scalar_lea.sflag [#allocation3], %s1445
        %s1447 = sand.u32 %s472, 1
        %s1448 = scalar_lea.vmem [#allocation2], %s1447
        // Predicated region
        $region101: #{bert_pair_forward.1} parent=99 // pred_check
          %p1449 = pneg %p482
        $region102: #{bert_pair_forward.1} parent=99 // pred_check_branch
          %1451 = sbr.rel (%p1449) target = $region104
        $region103: #{bert_pair_forward.1} parent=99 // pred_region
          %1453 = vsyncadd %s1446, 0
          %s1454 = scalar_lea.hbm %s20, %s34
          %s1456 = sshll.u32 %s1448, 4
          %s1457 = int_to_ptr.vmem [resolvable:$true] %s1456
          %s1458 = sshll.u32 %s1454, 4
          %s1459 = int_to_ptr.hbm [resolvable:$true] %s1458
          %1461 = dma.vmem_to_hbm [thread:$0]  %s1457, 16, %s1459, %s1446
        $region104: #{bert_pair_forward.1} parent=99 // pred_fallthru
          _
      $region100: #{bert_pair_forward.1} parent=5 // pred_fallthru
        _
      %p1462 = scmp.le.s32.totalorder 2, %s29
      // Predicated region
      $region105: #{bert_pair_forward.1} parent=5 // pred_check
        %p1463 = pneg %p1462
      $region106: #{bert_pair_forward.1} parent=5 // pred_check_branch
        %1465 = sbr.rel (%p1463) target = $region108
      $region107: #{bert_pair_forward.1} parent=5 // pred_region
        %s1466 = ssub.s32 %s29, 2
        // Predicated region
        $region109: #{bert_pair_forward.1} parent=107 // pred_check
          %p1467 = pneg %p488
        $region110: #{bert_pair_forward.1} parent=107 // pred_check_branch
          %1469 = sbr.rel (%p1467) target = $region112
        $region111: #{bert_pair_forward.1} parent=107 // pred_region
          %s1470 = sand.u32 %s473, 1
          %s1471 = scalar_lea.sflag [#allocation3], %s1470
          %s1472 = sand.u32 %s473, 1
          %s1473 = scalar_lea.vmem [#allocation2], %s1472
          %1475 = dma.done %s1471, 16
        $region112: #{bert_pair_forward.1} parent=107 // pred_fallthru
          _
      $region108: #{bert_pair_forward.1} parent=5 // pred_fallthru
        _
    $region6: #{bert_pair_forward.1} parent=1 // loop_footer
      %s33 = sadd.s32 1, %s29
    $region7: #{bert_pair_forward.1} parent=1 // loop_footer_branch
      %28 = sbr.rel target = $region3
    $region8: #{bert_pair_forward.1} parent=1 // loop_exit
      _
    %1476 = vsyncpa [#allocation3], 1
    %s1477 = scalar_lea.sflag [#allocation3], 1
    %1478 = vsyncpa %s1477, 1

</llo_original>
